<compile_context>
chip_gen: v7x
topology: tpu7x:2x2x1
jax: 0.10.0
libtpu: 0.0.40
codegen_flags: <defaults>
</compile_context>

<pallas_src>
import functools

import jax
import jax.numpy as jnp
from jax.experimental import pallas as pl
from jax.experimental.pallas import tpu as pltpu

_EPS = 1e-5
_LANE = 128


def _round_up(v, m):
    return (v + m - 1) // m * m


def _tpu_vmem_limit_bytes():
    """~75% of this generation's physical VMEM (conservative 48 MiB fallback)."""
    try:
        cap = int(getattr(pltpu.get_tpu_info(), "vmem_capacity_bytes"))
    except Exception:
        cap = 64 * 1024 * 1024
    return max(32 * 1024 * 1024, cap * 3 // 4)


def _use_bf16_vpu():
    """bf16 VALU exists on v6e / v7x; keep the f32 elementwise path elsewhere (v5e)."""
    try:
        kind = jax.devices()[0].device_kind.lower()
    except Exception:
        return False
    return ("v6" in kind) or ("v7" in kind) or ("7x" in kind)


# --------------------------------------------------------------------------- kernels
def _dw_conv_kernel(x_hbm, w_ref, y_ref, s_ref, sq_ref, xbuf, sem,
                    *, TH, W, K, nH, H):
    """Depthwise KxK conv (stride 1) on one halo'd row strip + partial BN1 stats.

    The padded input lives in HBM; the (TH+K-1)-row halo window is DMA'd manually
    into a double-buffered VMEM scratch (no overlapping strips ever hit HBM), and the
    next strip of the SAME image is prefetched while the current one is processed.
    """
    n = pl.program_id(0)
    h = pl.program_id(1)
    THK = TH + K - 1
    slot = h % 2

    def fetch(nn, hh, sl):
        pltpu.make_async_copy(x_hbm.at[nn, pl.ds(hh * TH, THK)],
                              xbuf.at[sl], sem.at[sl]).start()

    @pl.when(h == 0)
    def _():
        fetch(n, 0, 0)                      # first strip of this image: no overlap yet

    # Wait for the current window (descriptor only needs matching shape/size).
    pltpu.make_async_copy(x_hbm.at[n, pl.ds(0, THK)],
                          xbuf.at[slot], sem.at[slot]).wait()

    # Prefetch the next strip of the same image into the other slot.  Guarded by the
    # image boundary so every started DMA is waited on by the same core (safe under
    # megacore sharding of the batch axis).
    @pl.when(h + 1 < nH)
    def _():
        fetch(n, h + 1, 1 - slot)

    Cp = w_ref.shape[-1]
    wv = w_ref[...]                          # (K*K, Cp) f32
    xw = xbuf[slot]                          # (THK, Wp, Cp) bf16
    acc = jnp.zeros((TH, W, Cp), jnp.float32)
    for kh in range(K):
        rows = xw[kh:kh + TH].astype(jnp.float32)     # one f32 row slab live at a time
        for kw in range(K):
            acc = acc + rows[:, kw:kw + W, :] * wv[kh * K + kw][None, None, :]

    y_ref[0] = acc.astype(y_ref.dtype)       # bf16 store: halves y's HBM traffic

    if nH * TH != H:                         # ragged last strip: mask pad rows from stats
        rid = jax.lax.broadcasted_iota(jnp.int32, (TH, W), 0) + h * TH
        m = (rid < H).astype(jnp.float32)[:, :, None]
        s_ref[...] = jnp.sum(acc * m, axis=(0, 1)).reshape(1, 1, 1, Cp)
        sq_ref[...] = jnp.sum(acc * acc * m, axis=(0, 1)).reshape(1, 1, 1, Cp)
    else:
        s_ref[...] = jnp.sum(acc, axis=(0, 1)).reshape(1, 1, 1, Cp)
        sq_ref[...] = jnp.sum(acc * acc, axis=(0, 1)).reshape(1, 1, 1, Cp)


def _bn_relu6_pw_kernel(y_ref, a_ref, b_ref, wp_ref, p_ref, s_ref, sq_ref,
                        *, TH, W, H, nH, bf16_affine):
    """Folded BN1 affine + ReLU6 + pointwise 1x1 conv (bf16 MXU) + partial BN2 stats."""
    h = pl.program_id(1)
    Cp = y_ref.shape[-1]
    COp = wp_ref.shape[-1]

    if bf16_affine:                          # v6e/v7x: bf16 VALU, no up/down cast passes
        z = y_ref[0] * a_ref[0][None, None, :] + b_ref[0][None, None, :]
        z = jnp.clip(z, 0.0, 6.0)            # ReLU6 in bf16
        zb = z.reshape(TH * W, Cp)
    else:                                    # v5e: f32 VPU path
        z = y_ref[0].astype(jnp.float32) * a_ref[0][None, None, :] + b_ref[0][None, None, :]
        z = jnp.clip(z, 0.0, 6.0)
        zb = z.astype(jnp.bfloat16).reshape(TH * W, Cp)

    p = jnp.dot(zb, wp_ref[...], preferred_element_type=jnp.float32)   # MXU, f32 acc
    p_ref[0] = p.reshape(TH, W, COp).astype(p_ref.dtype)               # bf16 store

    if nH * TH != H:                         # mask padded rows out of BN2 stats
        rid = jax.lax.broadcasted_iota(jnp.int32, (TH, W), 0) + h * TH
        m = (rid < H).astype(jnp.float32).reshape(TH * W, 1)
        s_ref[...] = jnp.sum(p * m, axis=0).reshape(1, 1, 1, COp)
        sq_ref[...] = jnp.sum(p * p * m, axis=0).reshape(1, 1, 1, COp)
    else:
        s_ref[...] = jnp.sum(p, axis=0).reshape(1, 1, 1, COp)
        sq_ref[...] = jnp.sum(p * p, axis=0).reshape(1, 1, 1, COp)


# --------------------------------------------------------------------------- pallas wrappers
def _depthwise_conv_stats(xp, w_flat, N, nH, TH, W, K, H, vmem_limit):
    _, _, Wp, Cp = xp.shape
    THK = TH + K - 1
    kern = functools.partial(_dw_conv_kernel, TH=TH, W=W, K=K, nH=nH, H=H)
    return pl.pallas_call(
        kern,
        grid=(N, nH),
        in_specs=[pl.BlockSpec(memory_space=pl.ANY),              # padded input stays in HBM
                  pl.BlockSpec((K * K, Cp), lambda n, h: (0, 0))],
        out_specs=[pl.BlockSpec((1, TH, W, Cp), lambda n, h: (n, h, 0, 0)),
                   pl.BlockSpec((1, 1, 1, Cp), lambda n, h: (n, h, 0, 0)),
                   pl.BlockSpec((1, 1, 1, Cp), lambda n, h: (n, h, 0, 0))],
        out_shape=[jax.ShapeDtypeStruct((N, nH * TH, W, Cp), jnp.bfloat16),
                   jax.ShapeDtypeStruct((N, nH, 1, Cp), jnp.float32),
                   jax.ShapeDtypeStruct((N, nH, 1, Cp), jnp.float32)],
        scratch_shapes=[pltpu.VMEM((2, THK, Wp, Cp), jnp.bfloat16),   # manual halo double-buffer
                        pltpu.SemaphoreType.DMA((2,))],
        compiler_params=pltpu.CompilerParams(
            dimension_semantics=("parallel", "arbitrary"),
            vmem_limit_bytes=vmem_limit),
    )(xp, w_flat)


def _bn_relu6_pointwise_stats(y, a1p, b1p, wp, N, nH, TH, W, H, vmem_limit, bf16_affine):
    Cp = y.shape[-1]
    COp = wp.shape[1]
    kern = functools.partial(_bn_relu6_pw_kernel, TH=TH, W=W, H=H, nH=nH,
                             bf16_affine=bf16_affine)
    return pl.pallas_call(
        kern,
        grid=(N, nH),
        in_specs=[pl.BlockSpec((1, TH, W, Cp), lambda n, h: (n, h, 0, 0)),
                  pl.BlockSpec((1, Cp), lambda n, h: (0, 0)),
                  pl.BlockSpec((1, Cp), lambda n, h: (0, 0)),
                  pl.BlockSpec((Cp, COp), lambda n, h: (0, 0))],
        out_specs=[pl.BlockSpec((1, TH, W, COp), lambda n, h: (n, h, 0, 0)),
                   pl.BlockSpec((1, 1, 1, COp), lambda n, h: (n, h, 0, 0)),
                   pl.BlockSpec((1, 1, 1, COp), lambda n, h: (n, h, 0, 0))],
        out_shape=[jax.ShapeDtypeStruct((N, nH * TH, W, COp), jnp.bfloat16),
                   jax.ShapeDtypeStruct((N, nH, 1, COp), jnp.float32),
                   jax.ShapeDtypeStruct((N, nH, 1, COp), jnp.float32)],
        compiler_params=pltpu.CompilerParams(
            dimension_semantics=("parallel", "parallel"),
            vmem_limit_bytes=vmem_limit),
    )(y, a1p, b1p, wp)


# --------------------------------------------------------------------------- tiling
def _pick_tile_h(H, W, Wp, Cp, COp, K, budget_bytes):
    """Largest multiple-of-8 strip height whose live per-step footprint fits the budget."""
    hi = _round_up(max(H, 8), 8)
    best = 8
    th = 8
    while th <= hi:
        thk = th + K - 1
        footprint = (
            2 * thk * Wp * Cp * 2            # bf16 halo double-buffer (stage 1)
            + 2 * th * W * Cp * 2            # bf16 y block double-buffer (both stages)
            + th * Wp * Cp * 4               # one f32 row slab
            + 2 * th * W * Cp * 4            # f32 accumulator + one shifted slab
            + 2 * th * W * COp * 2           # bf16 p block double-buffer (stage 2)
            + th * W * COp * 4               # f32 matmul result
            + Cp * COp * 2 + 2 * K * K * Cp * 4
        )
        if footprint <= budget_bytes:
            best = th
        th += 8
    return best


# --------------------------------------------------------------------------- layer wrapper
def ds_conv_layer_nhwc(x_nhwc, w_dw, gamma1, beta1, w_pw, gamma2, beta2, *, tile_h=None):
    """DsConvLayer forward on NHWC input (training-mode BatchNorm).  Returns NHWC f32."""
    # TODO(synk): only stride=1 (the module default) is implemented; strided depthwise is not wired up.
    N, H, W, C = x_nhwc.shape
    CO = w_pw.shape[0]
    K = w_dw.shape[-1]
    pad = K // 2
    Cp = _round_up(C, _LANE)                 # lane-dense channel padding
    COp = _round_up(CO, _LANE)
    Wp = _round_up(W + 2 * pad, 16)          # sublane-dense bf16 halo buffer

    vmem_limit = _tpu_vmem_limit_bytes()     # generation-aware (v5e/v6e ~96 MiB, v7x ~48 MiB)
    bf16_affine = _use_bf16_vpu()

    if tile_h is None:
        tile_h = _pick_tile_h(H, W, Wp, Cp, COp, K, vmem_limit // 8)
    Hpad = _round_up(H, tile_h)              # ragged H: pad rows, exclude them from stats
    nH = Hpad // tile_h
    cnt = N * H * W

    # Single padded copy of the input in HBM (bf16); the depthwise kernel DMAs its
    # overlapping halo windows straight out of it — no materialized strip gather.
    xp = jnp.pad(x_nhwc, ((0, 0), (pad, Hpad - H + pad), (pad, Wp - W - pad), (0, Cp - C)))
    xp = xp.astype(jnp.bfloat16)

    w_flat = jnp.transpose(w_dw[:, 0], (1, 2, 0)).reshape(K * K, C)
    w_flat = jnp.pad(w_flat, ((0, 0), (0, Cp - C))).astype(jnp.float32)
    wp = jnp.transpose(w_pw[:, :, 0, 0], (1, 0))                       # (C, CO)
    wp = jnp.pad(wp, ((0, Cp - C), (0, COp - CO))).astype(jnp.bfloat16)

    # ---- stage 1: depthwise conv + per-strip partial BN1 stats (Pallas)
    y, s1b, sq1b = _depthwise_conv_stats(xp, w_flat, N, nH, tile_h, W, K, H, vmem_limit)
    s1 = jnp.sum(s1b, axis=(0, 1, 2))[:C]
    sq1 = jnp.sum(sq1b, axis=(0, 1, 2))[:C]
    mean1 = s1 / cnt
    var1 = sq1 / cnt - mean1 * mean1                                   # biased var (BN train)
    a1 = gamma1 * jax.lax.rsqrt(var1 + _EPS)
    b1 = beta1 - mean1 * a1
    aff_dt = jnp.bfloat16 if bf16_affine else jnp.float32
    a1p = jnp.zeros((1, Cp), jnp.float32).at[0, :C].set(a1).astype(aff_dt)   # padded lanes -> 0
    b1p = jnp.zeros((1, Cp), jnp.float32).at[0, :C].set(b1).astype(aff_dt)

    # ---- stage 2: BN1 affine + ReLU6 + pointwise 1x1 (bf16 MXU) + partial BN2 stats (Pallas)
    p, s2b, sq2b = _bn_relu6_pointwise_stats(y, a1p, b1p, wp, N, nH, tile_h, W, H,
                                             vmem_limit, bf16_affine)
    s2 = jnp.sum(s2b, axis=(0, 1, 2))[:CO]
    sq2 = jnp.sum(sq2b, axis=(0, 1, 2))[:CO]
    mean2 = s2 / cnt
    var2 = sq2 / cnt - mean2 * mean2
    a2 = gamma2 * jax.lax.rsqrt(var2 + _EPS)
    b2 = beta2 - mean2 * a2

    # ---- stage 3: BN2 affine (no activation) in plain jnp so XLA fuses it with the
    #      row/channel slice and any downstream transpose (no extra HBM pass).
    p_valid = p[:, :H, :, :CO].astype(jnp.float32)
    return p_valid * a2[None, None, None, :] + b2[None, None, None, :]


def ds_conv_layer(x_nchw, w_dw, gamma1, beta1, w_pw, gamma2, beta2, *, tile_h=None):
    """NCHW wrapper matching the PyTorch module's convention."""
    x_nhwc = jnp.transpose(x_nchw, (0, 2, 3, 1))
    out_nhwc = ds_conv_layer_nhwc(x_nhwc, w_dw, gamma1, beta1, w_pw, gamma2, beta2,
                                  tile_h=tile_h)
    return jnp.transpose(out_nhwc, (0, 3, 1, 2))


# --------------------------------------------------------------------------- reference
def _ref_forward(x, w_dw, gamma1, beta1, w_pw, gamma2, beta2):
    C = x.shape[1]
    y = jax.lax.conv_general_dilated(x, w_dw, (1, 1), ((1, 1), (1, 1)),
                                     feature_group_count=C,
                                     dimension_numbers=("NCHW", "OIHW", "NCHW"))
    m, v = y.mean(axis=(0, 2, 3)), y.var(axis=(0, 2, 3))
    y = (y - m[None, :, None, None]) / jnp.sqrt(v + _EPS)[None, :, None, None]
    y = y * gamma1[None, :, None, None] + beta1[None, :, None, None]
    y = jnp.clip(y, 0.0, 6.0)
    p = jax.lax.conv_general_dilated(y, w_pw, (1, 1), "VALID",
                                     dimension_numbers=("NCHW", "OIHW", "NCHW"))
    m2, v2 = p.mean(axis=(0, 2, 3)), p.var(axis=(0, 2, 3))
    p = (p - m2[None, :, None, None]) / jnp.sqrt(v2 + _EPS)[None, :, None, None]
    return p * gamma2[None, :, None, None] + beta2[None, :, None, None]


# --------------------------------------------------------------------------- main
if __name__ == "__main__":
    def run_case(N, C, CO, H, W, K, tile_h, seed):
        key = jax.random.PRNGKey(seed)
        k1, k2, k3, k4, k5, k6, k7 = jax.random.split(key, 7)
        x = jax.random.normal(k1, (N, C, H, W), jnp.float32)
        w_dw = 0.3 * jax.random.normal(k2, (C, 1, K, K), jnp.float32)      # depthwise weight
        gamma1 = 1.0 + 0.1 * jax.random.normal(k3, (C,), jnp.float32)      # BN1 weight
        beta1 = 0.1 * jax.random.normal(k4, (C,), jnp.float32)             # BN1 bias
        w_pw = 0.3 * jax.random.normal(k5, (CO, C, 1, 1), jnp.float32)     # pointwise weight
        gamma2 = 1.0 + 0.1 * jax.random.normal(k6, (CO,), jnp.float32)     # BN2 weight
        beta2 = 0.1 * jax.random.normal(k7, (CO,), jnp.float32)            # BN2 bias

        out = ds_conv_layer(x, w_dw, gamma1, beta1, w_pw, gamma2, beta2, tile_h=tile_h)
        out = jax.block_until_ready(out)
        ref = _ref_forward(x, w_dw, gamma1, beta1, w_pw, gamma2, beta2)
        assert out.shape == (N, CO, H, W), out.shape
        max_err = float(jnp.abs(out - ref).max())
        # bf16 input / y / p storage + bf16 MXU operands (f32 accumulation) -> bf16-level tolerance.
        assert jnp.allclose(out, ref, atol=3e-2, rtol=3e-2), (max_err, (N, C, CO, H, W))
        return max_err

    # Main case: tile_h=8 -> 2 strips/image (grid (2,2)) so the halo DMA double-buffering,
    # strip prefetch and the multi-strip stats reduction are exercised at this toy size.
    run_case(N=2, C=4, CO=8, H=16, W=16, K=3, tile_h=8, seed=0)
    # Ragged case: H=W=7 exercises strip padding + the masked BN-stats path (auto tile_h).
    run_case(N=1, C=4, CO=8, H=7, W=7, K=3, tile_h=None, seed=1)

    print("KERNEL_OK")
</pallas_src>

<mosaic_0001>
module attributes {stable_mosaic.version = 11 : i64} {
  func.func @_dw_conv_kernel(%arg0: i32, %arg1: i32, %arg2: memref<2x18x32x128xbf16, #tpu.memory_space<any>>, %arg3: memref<9x128xf32, #tpu.memory_space<vmem>>, %arg4: memref<1x8x16x128xbf16, #tpu.memory_space<vmem>>, %arg5: memref<1x1x1x128xf32, #tpu.memory_space<vmem>>, %arg6: memref<1x1x1x128xf32, #tpu.memory_space<vmem>>, %arg7: memref<2x10x32x128xbf16, #tpu.memory_space<vmem>>, %arg8: memref<2x!tpu.dma_semaphore, #tpu.memory_space<semaphore_mem>>) attributes {dimension_semantics = [#tpu.dimension_semantics<parallel>, #tpu.dimension_semantics<arbitrary>], iteration_bounds = array<i64: 2, 2>, scalar_prefetch = 0 : i64, scratch_operands = 2 : i64, tpu.core_type = #tpu.core_type<tc>, window_params = [{}, {pipeline_mode = #tpu.pipeline_mode<synchronous>, transform_indices = @transform_1, window_bounds = array<i64: 9, 128>}, {transform_indices = @transform_2, window_bounds = array<i64: 1, 8, 16, 128>}, {transform_indices = @transform_3, window_bounds = array<i64: 1, 1, 1, 128>}, {transform_indices = @transform_4, window_bounds = array<i64: 1, 1, 1, 128>}]} {
    %c2_i32 = arith.constant 2 : i32
    %c0_i32 = arith.constant 0 : i32
    %0 = arith.cmpi eq, %c2_i32, %c0_i32 : i32
    %c1_i32 = arith.constant 1 : i32
    %1 = arith.select %0, %c1_i32, %c2_i32 : i32
    %2 = arith.remsi %arg1, %1 : i32
    %c0_i32_0 = arith.constant 0 : i32
    %3 = arith.cmpi ne, %2, %c0_i32_0 : i32
    %c0_i32_1 = arith.constant 0 : i32
    %4 = arith.cmpi slt, %2, %c0_i32_1 : i32
    %c0_i32_2 = arith.constant 0 : i32
    %5 = arith.cmpi slt, %1, %c0_i32_2 : i32
    %6 = arith.xori %4, %5 : i1
    %7 = arith.andi %6, %3 : i1
    %8 = arith.addi %2, %1 : i32
    %9 = arith.select %7, %8, %2 : i32
    %c0_i32_3 = arith.constant 0 : i32
    %10 = arith.cmpi eq, %arg1, %c0_i32_3 : i32
    %11 = arith.extui %10 : i1 to i32
    %c0_i32_4 = arith.constant 0 : i32
    %12 = arith.cmpi ne, %11, %c0_i32_4 : i32
    scf.if %12 {
      %c0_i32_32 = arith.constant 0 : i32
      %c0_i32_33 = arith.constant 0 : i32
      %c0_i32_34 = arith.constant 0 : i32
      %c0_i32_35 = arith.constant 0 : i32
      %c0_i32_36 = arith.constant 0 : i32
      %108 = tpu.memref_slice %arg2[%arg0, %c0_i32_34, %c0_i32_35, %c0_i32_36] : memref<2x18x32x128xbf16, #tpu.memory_space<any>> -> memref<1x10x32x128xbf16, #tpu.memory_space<any>>
      %109 = tpu.memref_squeeze %108 : memref<1x10x32x128xbf16, #tpu.memory_space<any>> -> memref<10x32x128xbf16, #tpu.memory_space<any>>
      %c0_i32_37 = arith.constant 0 : i32
      %c0_i32_38 = arith.constant 0 : i32
      %c0_i32_39 = arith.constant 0 : i32
      %110 = tpu.memref_slice %arg7[%c0_i32_32, %c0_i32_37, %c0_i32_38, %c0_i32_39] : memref<2x10x32x128xbf16, #tpu.memory_space<vmem>> -> memref<1x10x32x128xbf16, #tpu.memory_space<vmem>>
      %111 = tpu.memref_squeeze %110 : memref<1x10x32x128xbf16, #tpu.memory_space<vmem>> -> memref<10x32x128xbf16, #tpu.memory_space<vmem>>
      %112 = tpu.memref_slice %arg8[%c0_i32_33] : memref<2x!tpu.dma_semaphore, #tpu.memory_space<semaphore_mem>> -> memref<1x!tpu.dma_semaphore, #tpu.memory_space<semaphore_mem>>
      %113 = tpu.memref_squeeze %112 : memref<1x!tpu.dma_semaphore, #tpu.memory_space<semaphore_mem>> -> memref<!tpu.dma_semaphore, #tpu.memory_space<semaphore_mem>>
      tpu.enqueue_dma source(%109 : memref<10x32x128xbf16, #tpu.memory_space<any>>) target(%111 : memref<10x32x128xbf16, #tpu.memory_space<vmem>>) target_semaphore(%113 : memref<!tpu.dma_semaphore, #tpu.memory_space<semaphore_mem>>)
    } else {
    }
    %c0_i32_5 = arith.constant 0 : i32
    %c0_i32_6 = arith.constant 0 : i32
    %c0_i32_7 = arith.constant 0 : i32
    %13 = tpu.memref_slice %arg2[%arg0, %c0_i32_5, %c0_i32_6, %c0_i32_7] : memref<2x18x32x128xbf16, #tpu.memory_space<any>> -> memref<1x10x32x128xbf16, #tpu.memory_space<any>>
    %14 = tpu.memref_squeeze %13 : memref<1x10x32x128xbf16, #tpu.memory_space<any>> -> memref<10x32x128xbf16, #tpu.memory_space<any>>
    %c0_i32_8 = arith.constant 0 : i32
    %c0_i32_9 = arith.constant 0 : i32
    %c0_i32_10 = arith.constant 0 : i32
    %15 = tpu.memref_slice %arg7[%9, %c0_i32_8, %c0_i32_9, %c0_i32_10] : memref<2x10x32x128xbf16, #tpu.memory_space<vmem>> -> memref<1x10x32x128xbf16, #tpu.memory_space<vmem>>
    %16 = tpu.memref_squeeze %15 : memref<1x10x32x128xbf16, #tpu.memory_space<vmem>> -> memref<10x32x128xbf16, #tpu.memory_space<vmem>>
    %17 = tpu.memref_slice %arg8[%9] : memref<2x!tpu.dma_semaphore, #tpu.memory_space<semaphore_mem>> -> memref<1x!tpu.dma_semaphore, #tpu.memory_space<semaphore_mem>>
    %18 = tpu.memref_squeeze %17 : memref<1x!tpu.dma_semaphore, #tpu.memory_space<semaphore_mem>> -> memref<!tpu.dma_semaphore, #tpu.memory_space<semaphore_mem>>
    tpu.wait_dma2 semaphore(%18 : memref<!tpu.dma_semaphore, #tpu.memory_space<semaphore_mem>>) src(%14 : memref<10x32x128xbf16, #tpu.memory_space<any>>) dst(%16 : memref<10x32x128xbf16, #tpu.memory_space<vmem>>)
    %c1_i32_11 = arith.constant 1 : i32
    %19 = arith.addi %arg1, %c1_i32_11 : i32
    %c2_i32_12 = arith.constant 2 : i32
    %20 = arith.cmpi slt, %19, %c2_i32_12 : i32
    %21 = arith.extui %20 : i1 to i32
    %c0_i32_13 = arith.constant 0 : i32
    %22 = arith.cmpi ne, %21, %c0_i32_13 : i32
    scf.if %22 {
      %c1_i32_32 = arith.constant 1 : i32
      %108 = arith.addi %arg1, %c1_i32_32 : i32
      %c1_i32_33 = arith.constant 1 : i32
      %109 = arith.subi %c1_i32_33, %9 : i32
      %c8_i32 = arith.constant 8 : i32
      %110 = arith.muli %108, %c8_i32 : i32
      %c0_i32_34 = arith.constant 0 : i32
      %c0_i32_35 = arith.constant 0 : i32
      %111 = tpu.memref_slice %arg2[%arg0, %110, %c0_i32_34, %c0_i32_35] : memref<2x18x32x128xbf16, #tpu.memory_space<any>> -> memref<1x10x32x128xbf16, #tpu.memory_space<any>>
      %112 = tpu.memref_squeeze %111 : memref<1x10x32x128xbf16, #tpu.memory_space<any>> -> memref<10x32x128xbf16, #tpu.memory_space<any>>
      %c0_i32_36 = arith.constant 0 : i32
      %c0_i32_37 = arith.constant 0 : i32
      %c0_i32_38 = arith.constant 0 : i32
      %113 = tpu.memref_slice %arg7[%109, %c0_i32_36, %c0_i32_37, %c0_i32_38] : memref<2x10x32x128xbf16, #tpu.memory_space<vmem>> -> memref<1x10x32x128xbf16, #tpu.memory_space<vmem>>
      %114 = tpu.memref_squeeze %113 : memref<1x10x32x128xbf16, #tpu.memory_space<vmem>> -> memref<10x32x128xbf16, #tpu.memory_space<vmem>>
      %115 = tpu.memref_slice %arg8[%109] : memref<2x!tpu.dma_semaphore, #tpu.memory_space<semaphore_mem>> -> memref<1x!tpu.dma_semaphore, #tpu.memory_space<semaphore_mem>>
      %116 = tpu.memref_squeeze %115 : memref<1x!tpu.dma_semaphore, #tpu.memory_space<semaphore_mem>> -> memref<!tpu.dma_semaphore, #tpu.memory_space<semaphore_mem>>
      tpu.enqueue_dma source(%112 : memref<10x32x128xbf16, #tpu.memory_space<any>>) target(%114 : memref<10x32x128xbf16, #tpu.memory_space<vmem>>) target_semaphore(%116 : memref<!tpu.dma_semaphore, #tpu.memory_space<semaphore_mem>>)
    } else {
    }
    %c0 = arith.constant 0 : index
    %c0_14 = arith.constant 0 : index
    %23 = vector.load %arg3[%c0, %c0_14] : memref<9x128xf32, #tpu.memory_space<vmem>>, vector<9x128xf32>
    %24 = arith.index_cast %9 : i32 to index
    %c0_15 = arith.constant 0 : index
    %c0_16 = arith.constant 0 : index
    %c0_17 = arith.constant 0 : index
    %25 = vector.load %arg7[%24, %c0_15, %c0_16, %c0_17] : memref<2x10x32x128xbf16, #tpu.memory_space<vmem>>, vector<1x10x32x128xbf16>
    %26 = vector.shape_cast %25 : vector<1x10x32x128xbf16> to vector<10x32x128xbf16>
    %cst = arith.constant 0.000000e+00 : f32
    %27 = vector.broadcast %cst : f32 to vector<8x16x128xf32>
    %28 = vector.extract_strided_slice %26 {offsets = [0, 0, 0], sizes = [8, 32, 128], strides = [1, 1, 1]} : vector<10x32x128xbf16> to vector<8x32x128xbf16>
    %29 = arith.extf %28 : vector<8x32x128xbf16> to vector<8x32x128xf32>
    %30 = vector.extract_strided_slice %29 {offsets = [0, 0, 0], sizes = [8, 16, 128], strides = [1, 1, 1]} : vector<8x32x128xf32> to vector<8x16x128xf32>
    %31 = vector.extract_strided_slice %23 {offsets = [0, 0], sizes = [1, 128], strides = [1, 1]} : vector<9x128xf32> to vector<1x128xf32>
    %32 = vector.shape_cast %31 : vector<1x128xf32> to vector<128xf32>
    %33 = vector.shape_cast %32 : vector<128xf32> to vector<1x1x128xf32>
    %34 = vector.broadcast %33 : vector<1x1x128xf32> to vector<8x16x128xf32>
    %35 = arith.mulf %30, %34 : vector<8x16x128xf32>
    %36 = arith.addf %27, %35 : vector<8x16x128xf32>
    %37 = vector.extract_strided_slice %29 {offsets = [0, 1, 0], sizes = [8, 16, 128], strides = [1, 1, 1]} : vector<8x32x128xf32> to vector<8x16x128xf32>
    %38 = vector.extract_strided_slice %23 {offsets = [1, 0], sizes = [1, 128], strides = [1, 1]} : vector<9x128xf32> to vector<1x128xf32>
    %39 = vector.shape_cast %38 : vector<1x128xf32> to vector<128xf32>
    %40 = vector.shape_cast %39 : vector<128xf32> to vector<1x1x128xf32>
    %41 = vector.broadcast %40 : vector<1x1x128xf32> to vector<8x16x128xf32>
    %42 = arith.mulf %37, %41 : vector<8x16x128xf32>
    %43 = arith.addf %36, %42 : vector<8x16x128xf32>
    %44 = vector.extract_strided_slice %29 {offsets = [0, 2, 0], sizes = [8, 16, 128], strides = [1, 1, 1]} : vector<8x32x128xf32> to vector<8x16x128xf32>
    %45 = vector.extract_strided_slice %23 {offsets = [2, 0], sizes = [1, 128], strides = [1, 1]} : vector<9x128xf32> to vector<1x128xf32>
    %46 = vector.shape_cast %45 : vector<1x128xf32> to vector<128xf32>
    %47 = vector.shape_cast %46 : vector<128xf32> to vector<1x1x128xf32>
    %48 = vector.broadcast %47 : vector<1x1x128xf32> to vector<8x16x128xf32>
    %49 = arith.mulf %44, %48 : vector<8x16x128xf32>
    %50 = arith.addf %43, %49 : vector<8x16x128xf32>
    %51 = vector.extract_strided_slice %26 {offsets = [1, 0, 0], sizes = [8, 32, 128], strides = [1, 1, 1]} : vector<10x32x128xbf16> to vector<8x32x128xbf16>
    %52 = arith.extf %51 : vector<8x32x128xbf16> to vector<8x32x128xf32>
    %53 = vector.extract_strided_slice %52 {offsets = [0, 0, 0], sizes = [8, 16, 128], strides = [1, 1, 1]} : vector<8x32x128xf32> to vector<8x16x128xf32>
    %54 = vector.extract_strided_slice %23 {offsets = [3, 0], sizes = [1, 128], strides = [1, 1]} : vector<9x128xf32> to vector<1x128xf32>
    %55 = vector.shape_cast %54 : vector<1x128xf32> to vector<128xf32>
    %56 = vector.shape_cast %55 : vector<128xf32> to vector<1x1x128xf32>
    %57 = vector.broadcast %56 : vector<1x1x128xf32> to vector<8x16x128xf32>
    %58 = arith.mulf %53, %57 : vector<8x16x128xf32>
    %59 = arith.addf %50, %58 : vector<8x16x128xf32>
    %60 = vector.extract_strided_slice %52 {offsets = [0, 1, 0], sizes = [8, 16, 128], strides = [1, 1, 1]} : vector<8x32x128xf32> to vector<8x16x128xf32>
    %61 = vector.extract_strided_slice %23 {offsets = [4, 0], sizes = [1, 128], strides = [1, 1]} : vector<9x128xf32> to vector<1x128xf32>
    %62 = vector.shape_cast %61 : vector<1x128xf32> to vector<128xf32>
    %63 = vector.shape_cast %62 : vector<128xf32> to vector<1x1x128xf32>
    %64 = vector.broadcast %63 : vector<1x1x128xf32> to vector<8x16x128xf32>
    %65 = arith.mulf %60, %64 : vector<8x16x128xf32>
    %66 = arith.addf %59, %65 : vector<8x16x128xf32>
    %67 = vector.extract_strided_slice %52 {offsets = [0, 2, 0], sizes = [8, 16, 128], strides = [1, 1, 1]} : vector<8x32x128xf32> to vector<8x16x128xf32>
    %68 = vector.extract_strided_slice %23 {offsets = [5, 0], sizes = [1, 128], strides = [1, 1]} : vector<9x128xf32> to vector<1x128xf32>
    %69 = vector.shape_cast %68 : vector<1x128xf32> to vector<128xf32>
    %70 = vector.shape_cast %69 : vector<128xf32> to vector<1x1x128xf32>
    %71 = vector.broadcast %70 : vector<1x1x128xf32> to vector<8x16x128xf32>
    %72 = arith.mulf %67, %71 : vector<8x16x128xf32>
    %73 = arith.addf %66, %72 : vector<8x16x128xf32>
    %74 = vector.extract_strided_slice %26 {offsets = [2, 0, 0], sizes = [8, 32, 128], strides = [1, 1, 1]} : vector<10x32x128xbf16> to vector<8x32x128xbf16>
    %75 = arith.extf %74 : vector<8x32x128xbf16> to vector<8x32x128xf32>
    %76 = vector.extract_strided_slice %75 {offsets = [0, 0, 0], sizes = [8, 16, 128], strides = [1, 1, 1]} : vector<8x32x128xf32> to vector<8x16x128xf32>
    %77 = vector.extract_strided_slice %23 {offsets = [6, 0], sizes = [1, 128], strides = [1, 1]} : vector<9x128xf32> to vector<1x128xf32>
    %78 = vector.shape_cast %77 : vector<1x128xf32> to vector<128xf32>
    %79 = vector.shape_cast %78 : vector<128xf32> to vector<1x1x128xf32>
    %80 = vector.broadcast %79 : vector<1x1x128xf32> to vector<8x16x128xf32>
    %81 = arith.mulf %76, %80 : vector<8x16x128xf32>
    %82 = arith.addf %73, %81 : vector<8x16x128xf32>
    %83 = vector.extract_strided_slice %75 {offsets = [0, 1, 0], sizes = [8, 16, 128], strides = [1, 1, 1]} : vector<8x32x128xf32> to vector<8x16x128xf32>
    %84 = vector.extract_strided_slice %23 {offsets = [7, 0], sizes = [1, 128], strides = [1, 1]} : vector<9x128xf32> to vector<1x128xf32>
    %85 = vector.shape_cast %84 : vector<1x128xf32> to vector<128xf32>
    %86 = vector.shape_cast %85 : vector<128xf32> to vector<1x1x128xf32>
    %87 = vector.broadcast %86 : vector<1x1x128xf32> to vector<8x16x128xf32>
    %88 = arith.mulf %83, %87 : vector<8x16x128xf32>
    %89 = arith.addf %82, %88 : vector<8x16x128xf32>
    %90 = vector.extract_strided_slice %75 {offsets = [0, 2, 0], sizes = [8, 16, 128], strides = [1, 1, 1]} : vector<8x32x128xf32> to vector<8x16x128xf32>
    %91 = vector.extract_strided_slice %23 {offsets = [8, 0], sizes = [1, 128], strides = [1, 1]} : vector<9x128xf32> to vector<1x128xf32>
    %92 = vector.shape_cast %91 : vector<1x128xf32> to vector<128xf32>
    %93 = vector.shape_cast %92 : vector<128xf32> to vector<1x1x128xf32>
    %94 = vector.broadcast %93 : vector<1x1x128xf32> to vector<8x16x128xf32>
    %95 = arith.mulf %90, %94 : vector<8x16x128xf32>
    %96 = arith.addf %89, %95 : vector<8x16x128xf32>
    %97 = arith.truncf %96 : vector<8x16x128xf32> to vector<8x16x128xbf16>
    %c0_18 = arith.constant 0 : index
    %c0_19 = arith.constant 0 : index
    %c0_20 = arith.constant 0 : index
    %c0_21 = arith.constant 0 : index
    %98 = vector.load %arg4[%c0_18, %c0_19, %c0_20, %c0_21] : memref<1x8x16x128xbf16, #tpu.memory_space<vmem>>, vector<1x8x16x128xbf16>
    %99 = vector.shape_cast %98 : vector<1x8x16x128xbf16> to vector<8x16x128xbf16>
    %100 = vector.shape_cast %97 : vector<8x16x128xbf16> to vector<1x8x16x128xbf16>
    tpu.vector_store %arg4[%c0_18, %c0_19, %c0_20, %c0_21], %100 {strides = array<i32>} : memref<1x8x16x128xbf16, #tpu.memory_space<vmem>>, vector<1x8x16x128xbf16>,
    %cst_22 = arith.constant dense<0.000000e+00> : vector<128xf32>
    %101 = vector.multi_reduction <add>, %96, %cst_22 [0, 1] : vector<8x16x128xf32> to vector<128xf32>
    %102 = vector.shape_cast %101 : vector<128xf32> to vector<1x1x1x128xf32>
    %c0_23 = arith.constant 0 : index
    %c0_24 = arith.constant 0 : index
    %c0_25 = arith.constant 0 : index
    %c0_26 = arith.constant 0 : index
    %103 = vector.load %arg5[%c0_23, %c0_24, %c0_25, %c0_26] : memref<1x1x1x128xf32, #tpu.memory_space<vmem>>, vector<1x1x1x128xf32>
    tpu.vector_store %arg5[%c0_23, %c0_24, %c0_25, %c0_26], %102 {strides = array<i32>} : memref<1x1x1x128xf32, #tpu.memory_space<vmem>>, vector<1x1x1x128xf32>,
    %104 = arith.mulf %96, %96 : vector<8x16x128xf32>
    %cst_27 = arith.constant dense<0.000000e+00> : vector<128xf32>
    %105 = vector.multi_reduction <add>, %104, %cst_27 [0, 1] : vector<8x16x128xf32> to vector<128xf32>
    %106 = vector.shape_cast %105 : vector<128xf32> to vector<1x1x1x128xf32>
    %c0_28 = arith.constant 0 : index
    %c0_29 = arith.constant 0 : index
    %c0_30 = arith.constant 0 : index
    %c0_31 = arith.constant 0 : index
    %107 = vector.load %arg6[%c0_28, %c0_29, %c0_30, %c0_31] : memref<1x1x1x128xf32, #tpu.memory_space<vmem>>, vector<1x1x1x128xf32>
    tpu.vector_store %arg6[%c0_28, %c0_29, %c0_30, %c0_31], %106 {strides = array<i32>} : memref<1x1x1x128xf32, #tpu.memory_space<vmem>>, vector<1x1x1x128xf32>,
    return
  }
  func.func @transform_1(%arg0: i32, %arg1: i32) -> (i32, i32) {
    %c0_i32 = arith.constant 0 : i32
    %c0_i32_0 = arith.constant 0 : i32
    %c0_i32_1 = arith.constant 0 : i32
    return %c0_i32, %c0_i32_0 : i32, i32
  }
  func.func @transform_2(%arg0: i32, %arg1: i32) -> (i32, i32, i32, i32) {
    %c0_i32 = arith.constant 0 : i32
    %c0_i32_0 = arith.constant 0 : i32
    %c0_i32_1 = arith.constant 0 : i32
    return %arg0, %arg1, %c0_i32, %c0_i32_0 : i32, i32, i32, i32
  }
  func.func @transform_3(%arg0: i32, %arg1: i32) -> (i32, i32, i32, i32) {
    %c0_i32 = arith.constant 0 : i32
    %c0_i32_0 = arith.constant 0 : i32
    %c0_i32_1 = arith.constant 0 : i32
    return %arg0, %arg1, %c0_i32, %c0_i32_0 : i32, i32, i32, i32
  }
  func.func @transform_4(%arg0: i32, %arg1: i32) -> (i32, i32, i32, i32) {
    %c0_i32 = arith.constant 0 : i32
    %c0_i32_0 = arith.constant 0 : i32
    %c0_i32_1 = arith.constant 0 : i32
    return %arg0, %arg1, %c0_i32, %c0_i32_0 : i32, i32, i32, i32
  }
}

</mosaic_0001>

<llo_original>
// kernel: tpu_custom_call.1
$region0: #{tpu_custom_call.1}
  #allocation0 [shape = 'u32[]', space=smem, size = 0x4, offset = 0x4, fixed_abs, tag = 'smem constant byte address 0x4 - core index']
  #allocation1 [shape = 'u32[144,128]{1,0:T(1,128)}', space=vmem, size = 0x12000, scoped, tag = 'internal scratch']
  #allocation2 [shape = 'bf16[2,10,32,128]{3,2,1,0:T(16,128)(2,1)}', space=vmem, size = 0x28000, scoped, tag = 'scratch operand']
  #allocation3 [shape = 's32[2]{0}', space=sflag, size = 0x8, scoped, tag = 'scratch operand']
  #allocation11 [shape = 's32[]', space=sflag, size = 0x4, offset = 0, fixed_abs, tag = 'sflag constant byte address 0x0 - dummy sync flag']
  #allocation12 [shape = 's32[]', space=sflag, size = 0x4, offset = 0, fixed_abs, tag = 'sflag constant byte address 0x0 - dummy sync flag']
  #allocation13 [shape = 'u32[]', space=smem, size = 0x4, offset = 0x44, fixed_abs, tag = 'smem constant byte address 0x44 - assertion arg 0']
  #allocation14 [shape = 'u32[]', space=smem, size = 0x4, offset = 0x48, fixed_abs, tag = 'smem constant byte address 0x48 - assertion arg 1']
  #allocation15 [shape = 's32[]', space=sflag, size = 0x4, offset = 0, fixed_abs, tag = 'sflag constant byte address 0x0 - dummy sync flag']
  #allocation16 [shape = 's32[]', space=sflag, size = 0x4, offset = 0, fixed_abs, tag = 'sflag constant byte address 0x0 - dummy sync flag']
  %s0 = inlined_call_operand.hbm [shape: bf16[2,18,32,128], index: 0, kind: input, shape index: {}]
  %s1 = inlined_call_operand.hbm [shape: f32[9,128], index: 1, kind: input, shape index: {}]
  %s2 = inlined_call_operand.hbm [shape: bf16[2,16,16,128], index: 2, kind: output, shape index: {0}]
  %s3 = inlined_call_operand.hbm [shape: f32[2,2,1,128], index: 3, kind: output, shape index: {1}]
  %s4 = inlined_call_operand.hbm [shape: f32[2,2,1,128], index: 4, kind: output, shape index: {2}]
  %5 = xla_tuple %s2, %s3, %s4
  %s6 = sld [smem:[#allocation0]]
  $region73: #{tpu_custom_call.1} parent=0
    _
  %s8 = ssub.s32 1, %s6
  %s9 = scalar_select 0, %s8, %s6
  $region1: #{tpu_custom_call.1} parent=0
    #allocation4 [shape = 'u8[8192]{0}', space=vmem, size = 0x2000, scoped, tag = 'input window, operand 1, single buffered']
    #allocation5 [shape = 's32[2]{0}', space=sflag, size = 0x8, scoped, tag = 'scoped memory for tpu_custom_call.1']
    #allocation6 [shape = 's32[2]{0}', space=sflag, size = 0x8, scoped, tag = 'scoped memory for tpu_custom_call.1']
    #allocation7 [shape = 'u8[65536]{0}', space=vmem, size = 0x10000, scoped, tag = 'output window, operand 0']
    #allocation8 [shape = 'u8[1024]{0}', space=vmem, size = 0x400, scoped, tag = 'output window, operand 1']
    #allocation9 [shape = 's32[2]{0}', space=sflag, size = 0x8, scoped, tag = 'scoped memory for tpu_custom_call.1']
    #allocation10 [shape = 'u8[1024]{0}', space=vmem, size = 0x400, scoped, tag = 'output window, operand 2']
    %10 = vsyncpa [#allocation5], 0
    %11 = vsyncpa [#allocation6], 0
    %s12 = scalar_lea.sflag [#allocation6], 1
    %13 = vsyncpa %s12, 0
    %14 = vsyncpa [#allocation9], 0
    %s15 = scalar_lea.sflag [#allocation9], 1
    %16 = vsyncpa %s15, 0
    loop: start=0, step=1, limit=6
    $region2: #{tpu_custom_call.1} parent=1 // loop_pre_header
      _
    $region3: #{tpu_custom_call.1} parent=1 // loop_header
      %s18 = sphi 0, %s22
      %p19 = scmp.ge.s32.totalorder %s18, 6
      %s25 = sphi 0, %s37
      %s26 = sphi 0, %s33
      %s27 = sphi 0, %s25
      %s28 = sphi 0, %s26
      %s29 = sphi 0, %s27
      %s30 = sphi 0, %s28
      %s38 = sphi 0, %s38
      %s40 = sphi 0, %s38
      %s41 = sphi 0, %s40
      %s55 = sphi 0, %s41
      %s63 = sphi 0, %s65
      %s66 = sphi 0, %s63
      %s67 = sphi 0, %s66
      %s83 = sphi 0, %s67
      %s91 = sphi 0, %s93
      %s94 = sphi 0, %s91
      %s95 = sphi 0, %s94
      %s111 = sphi 0, %s95
      %s119 = sphi 0, %s121
      %s122 = sphi 0, %s119
      %s123 = sphi 0, %s122
      %s139 = sphi 0, %s123
    $region4: #{tpu_custom_call.1} parent=1 // loop_header_branch
      %21 = sbr.rel (%p19) target = $region8
    $region5: #{tpu_custom_call.1} parent=1 // loop_body
      %s23 = ssub.s32 %s18, 1
      %s24 = ssub.s32 %s18, 2
      %s31 = sadd.s32 1, %s26
      %p32 = scmp.ge.s32.totalorder %s31, 2
      %s33 = scalar_select %p32, 0, %s31
      %s34 = sadd.s32 1, %s25
      %s35 = scalar_select %p32, %s34, %s25
      %p36 = scmp.ge.s32.totalorder %s35, 2
      %s37 = scalar_select %p36, 0, %s35
      %s39 = sadd.s32 %s38, 1
      %p42 = scmp.eq.s32.totalorder %s18, 3
      %p43 = scmp.ne.s32.totalorder %s38, %s40
      %p44 = scmp.eq.s32.totalorder %s18, 0
      %p45 = por %p43, %p44
      %p46 = scmp.ne.s32.totalorder %s38, %s40
      %p47 = scmp.eq.s32.totalorder %s23, 3
      %p48 = por %p46, %p47
      %p49 = scmp.ne.s32.totalorder %s40, %s41
      %p50 = scmp.eq.s32.totalorder %s23, 0
      %p51 = por %p49, %p50
      %p52 = scmp.ne.s32.totalorder %s40, %s41
      %p53 = scmp.eq.s32.totalorder %s24, 3
      %p54 = por %p52, %p53
      %p56 = scmp.ne.s32.totalorder %s41, %s55
      %p57 = scmp.eq.s32.totalorder %s24, 0
      %p58 = por %p56, %p57
      %s59 = ssub.s32 %s25, %s37
      %s60 = ssub.s32 %s26, %s33
      %s61 = sor.u32 %s59, %s60
      %p62 = scmp.eq.s32.totalorder %s61, 0
      %s64 = sadd.s32 %s63, 1
      %s65 = scalar_select %p62, %s63, %s64
      %p68 = pneg %p62
      %p69 = scmp.eq.s32.totalorder %s18, 3
      %p70 = por %p68, %p69
      %p71 = scmp.ne.s32.totalorder %s63, %s66
      %p72 = scmp.eq.s32.totalorder %s18, 0
      %p73 = por %p71, %p72
      %p74 = scmp.ne.s32.totalorder %s63, %s66
      %p75 = scmp.eq.s32.totalorder %s23, 3
      %p76 = por %p74, %p75
      %p77 = scmp.ne.s32.totalorder %s66, %s67
      %p78 = scmp.eq.s32.totalorder %s23, 0
      %p79 = por %p77, %p78
      %p80 = scmp.ne.s32.totalorder %s66, %s67
      %p81 = scmp.eq.s32.totalorder %s24, 3
      %p82 = por %p80, %p81
      %p84 = scmp.ne.s32.totalorder %s67, %s83
      %p85 = scmp.eq.s32.totalorder %s24, 0
      %p86 = por %p84, %p85
      %s87 = ssub.s32 %s25, %s37
      %s88 = ssub.s32 %s26, %s33
      %s89 = sor.u32 %s87, %s88
      %p90 = scmp.eq.s32.totalorder %s89, 0
      %s92 = sadd.s32 %s91, 1
      %s93 = scalar_select %p90, %s91, %s92
      %p96 = pneg %p90
      %p97 = scmp.eq.s32.totalorder %s18, 3
      %p98 = por %p96, %p97
      %p99 = scmp.ne.s32.totalorder %s91, %s94
      %p100 = scmp.eq.s32.totalorder %s18, 0
      %p101 = por %p99, %p100
      %p102 = scmp.ne.s32.totalorder %s91, %s94
      %p103 = scmp.eq.s32.totalorder %s23, 3
      %p104 = por %p102, %p103
      %p105 = scmp.ne.s32.totalorder %s94, %s95
      %p106 = scmp.eq.s32.totalorder %s23, 0
      %p107 = por %p105, %p106
      %p108 = scmp.ne.s32.totalorder %s94, %s95
      %p109 = scmp.eq.s32.totalorder %s24, 3
      %p110 = por %p108, %p109
      %p112 = scmp.ne.s32.totalorder %s95, %s111
      %p113 = scmp.eq.s32.totalorder %s24, 0
      %p114 = por %p112, %p113
      %s115 = ssub.s32 %s25, %s37
      %s116 = ssub.s32 %s26, %s33
      %s117 = sor.u32 %s115, %s116
      %p118 = scmp.eq.s32.totalorder %s117, 0
      %s120 = sadd.s32 %s119, 1
      %s121 = scalar_select %p118, %s119, %s120
      %p124 = pneg %p118
      %p125 = scmp.eq.s32.totalorder %s18, 3
      %p126 = por %p124, %p125
      %p127 = scmp.ne.s32.totalorder %s119, %s122
      %p128 = scmp.eq.s32.totalorder %s18, 0
      %p129 = por %p127, %p128
      %p130 = scmp.ne.s32.totalorder %s119, %s122
      %p131 = scmp.eq.s32.totalorder %s23, 3
      %p132 = por %p130, %p131
      %p133 = scmp.ne.s32.totalorder %s122, %s123
      %p134 = scmp.eq.s32.totalorder %s23, 0
      %p135 = por %p133, %p134
      %p136 = scmp.ne.s32.totalorder %s122, %s123
      %p137 = scmp.eq.s32.totalorder %s24, 3
      %p138 = por %p136, %p137
      %p140 = scmp.ne.s32.totalorder %s123, %s139
      %p141 = scmp.eq.s32.totalorder %s24, 0
      %p142 = por %p140, %p141
      %p143 = scmp.le.s32.totalorder 1, %s18
      %p144 = scmp.lt.s32.totalorder %s18, 5
      %p145 = pnand %p143, %p144
      %p146 = pneg %p145
      // Predicated region
      $region9: #{tpu_custom_call.1} parent=5 // pred_check
        _
      $region10: #{tpu_custom_call.1} parent=5 // pred_check_branch
        %148 = sbr.rel (%p145) target = $region12
      $region11: #{tpu_custom_call.1} parent=5 // pred_region
        %s149 = ssub.s32 %s18, 1
        // Predicated region
        $region13: #{tpu_custom_call.1} parent=11 // pred_check
          %p150 = pneg %p51
        $region14: #{tpu_custom_call.1} parent=11 // pred_check_branch
          %152 = sbr.rel (%p150) target = $region16
        $region15: #{tpu_custom_call.1} parent=11 // pred_region
          %s154 = ssub.s32 256, 256
          %155 = vsyncadd [#allocation5], %s154
          %s156 = sshll.u32 [#allocation4], 4
          %s157 = int_to_ptr.vmem [resolvable:$true] %s156
          %162 = dma.hbm_to_vmem [thread:$0]  %s1, 256, %s157, [#allocation5], 128, 128, 8
        $region16: #{tpu_custom_call.1} parent=11 // pred_fallthru
          _
      $region12: #{tpu_custom_call.1} parent=5 // pred_fallthru
        _
      %p163 = scmp.lt.s32.totalorder %s18, 4
      // Predicated region
      $region17: #{tpu_custom_call.1} parent=5 // pred_check
        %p164 = pneg %p163
      $region18: #{tpu_custom_call.1} parent=5 // pred_check_branch
        %166 = sbr.rel (%p164) target = $region20
      $region19: #{tpu_custom_call.1} parent=5 // pred_region
        _
      $region20: #{tpu_custom_call.1} parent=5 // pred_fallthru
        _
      %p167 = scmp.le.s32.totalorder 1, %s18
      %p168 = scmp.lt.s32.totalorder %s18, 5
      %p169 = pnand %p167, %p168
      %p170 = pneg %p169
      // Predicated region
      $region21: #{tpu_custom_call.1} parent=5 // pred_check
        _
      $region22: #{tpu_custom_call.1} parent=5 // pred_check_branch
        %172 = sbr.rel (%p169) target = $region24
      $region23: #{tpu_custom_call.1} parent=5 // pred_region
        %s173 = ssub.s32 %s18, 1
        // Predicated region
        $region25: #{tpu_custom_call.1} parent=23 // pred_check
          %p174 = pneg %p51
        $region26: #{tpu_custom_call.1} parent=23 // pred_check_branch
          %176 = sbr.rel (%p174) target = $region28
        $region27: #{tpu_custom_call.1} parent=23 // pred_region
          %177 = dma.done [#allocation5], 256
        $region28: #{tpu_custom_call.1} parent=23 // pred_fallthru
          _
        %p178 = pneg %p51
        %p179 = pneg %p48
        %p180 = pneg %p79
        %p181 = pneg %p76
        %s182 = sand.u32 %s66, 1
        %s183 = scalar_lea.sflag [#allocation6], %s182
        %s184 = sand.u32 %s66, 1
        %s185 = smul.addr %s184, 64
        %s186 = scalar_lea.vmem [#allocation7], %s185
        %p187 = pneg %p107
        %p188 = pneg %p104
        %s189 = sand.u32 %s23, 1
        %s190 = scalar_lea.sflag [#allocation9], %s189
        %s191 = sand.u32 %s94, 1
        %s192 = scalar_lea.vmem [#allocation8], %s191
        %p193 = pneg %p135
        %p194 = pneg %p132
        %s195 = sand.u32 %s23, 1
        %s196 = scalar_lea.sflag [#allocation9], %s195
        %s197 = sand.u32 %s122, 1
        %s198 = scalar_lea.vmem [#allocation10], %s197
        %s199 = smul.u32 8, %s28
        %p200 = scmp.lt.s32.totalorder %s28, 0
        %s201 = ssub.s32 0, %s28
        %s202 = scalar_select %p200, %s201, %s28
        %s203 = sand.u32 %s202, 1
        %s204 = ssub.s32 0, %s203
        %s205 = scalar_select %p200, %s204, %s203
        %p206 = scmp.ne.s32.totalorder %s205, 0
        %p207 = scmp.lt.s32.totalorder %s205, 0
        %p208 = pnand %p207, %p206
        %p209 = pneg %p208
        %s210 = sadd.s32 %s205, 2
        %s211 = scalar_select %p209, %s210, %s205
        %p212 = scmp.eq.s32.totalorder %s28, 0
        // Predicated region
        $region29: #{tpu_custom_call.1} parent=23 // pred_check
          %p213 = pneg %p212
        $region30: #{tpu_custom_call.1} parent=23 // pred_check_branch
          %215 = sbr.rel (%p213) target = $region32
        $region31: #{tpu_custom_call.1} parent=23 // pred_region
          %s216 = smul.u32 %s27, 72
          %s217 = smul.addr %s216, 64
          %s218 = scalar_lea.hbm %s0, %s217
          // Predicated region
          $region33: #{tpu_custom_call.1} parent=31 // pred_check
            _
          $region34: #{tpu_custom_call.1} parent=31 // pred_check_branch
            %220 = sbr.rel target = $region36
          $region35: #{tpu_custom_call.1} parent=31 // pred_region
            %221 = sst [smem:[#allocation13]] [#allocation12]
            %222 = sst [smem:[#allocation14]] [#allocation11]
          $region36: #{tpu_custom_call.1} parent=31 // pred_fallthru
            _
          %224 = shalt.err (0)
          %s226 = sshll.u32 [#allocation2], 4
          %s227 = int_to_ptr.vmem [resolvable:$true] %s226
          %229 = dma.hbm_to_vmem [thread:$0]  %s218, 2560, %s227, [#allocation3]
        $region32: #{tpu_custom_call.1} parent=23 // pred_fallthru
          _
        %s230 = smul.u32 %s211, 20
        %s231 = smul.addr %s230, 8
        %s232 = scalar_lea.vmem [#allocation2], %s231
        %s233 = scalar_lea.sflag [#allocation3], %s211
        %s234 = smul.u32 4, 10
        %s235 = smul.u32 %s234, 4
        %s236 = smul.u32 %s235, 1
        %s237 = sshll.u32 %s236, 4
        %238 = dma.done %s233, %s237
        %s239 = sadd.s32 %s28, 1
        %p240 = scmp.lt.s32.totalorder %s239, 2
        // Predicated region
        $region37: #{tpu_custom_call.1} parent=23 // pred_check
          %p241 = pneg %p240
        $region38: #{tpu_custom_call.1} parent=23 // pred_check_branch
          %243 = sbr.rel (%p241) target = $region40
        $region39: #{tpu_custom_call.1} parent=23 // pred_region
          %s244 = ssub.s32 1, %s211
          %s245 = smul.u32 %s239, 8
          %s246 = smul.u32 %s245, 4
          %s247 = smul.u32 %s27, 72
          %s248 = sadd.s32 %s246, %s247
          %s249 = smul.addr %s248, 64
          %s250 = scalar_lea.hbm %s0, %s249
          %s251 = smul.u32 %s244, 20
          %s252 = smul.addr %s251, 8
          %s253 = scalar_lea.vmem [#allocation2], %s252
          %s254 = scalar_lea.sflag [#allocation3], %s244
          // Predicated region
          $region41: #{tpu_custom_call.1} parent=39 // pred_check
            _
          $region42: #{tpu_custom_call.1} parent=39 // pred_check_branch
            %256 = sbr.rel target = $region44
          $region43: #{tpu_custom_call.1} parent=39 // pred_region
            %257 = sst [smem:[#allocation13]] [#allocation16]
            %258 = sst [smem:[#allocation14]] [#allocation15]
          $region44: #{tpu_custom_call.1} parent=39 // pred_fallthru
            _
          %260 = shalt.err (0)
          %s262 = sshll.u32 %s253, 4
          %s263 = int_to_ptr.vmem [resolvable:$true] %s262
          %265 = dma.hbm_to_vmem [thread:$0]  %s250, 2560, %s263, %s254
        $region40: #{tpu_custom_call.1} parent=23 // pred_fallthru
          _
        %v266 = vld [vmem:[#allocation4] sm:$0xff]
        %v267 = vld [vmem:[#allocation4 + $0x8] sm:$0x1]
        %v268 = vld [vmem:[%s232] sm:$0xff]
        %v269 = vld [vmem:[%s232 + $0x8] sm:$0xff]
        %v270 = vld [vmem:[%s232 + $0x10] sm:$0xff]
        %v271 = vld [vmem:[%s232 + $0x18] sm:$0xff]
        %v272 = vld [vmem:[%s232 + $0x20] sm:$0xff]
        %v273 = vld [vmem:[%s232 + $0x28] sm:$0xff]
        %v274 = vld [vmem:[%s232 + $0x30] sm:$0xff]
        %v275 = vld [vmem:[%s232 + $0x38] sm:$0xff]
        %v276 = vld [vmem:[%s232 + $0x40] sm:$0xff]
        %v277 = vld [vmem:[%s232 + $0x48] sm:$0xff]
        %v278 = vld [vmem:[%s232 + $0x50] sm:$0xff]
        %v279 = vld [vmem:[%s232 + $0x58] sm:$0xff]
        %v280 = vld [vmem:[%s232 + $0x60] sm:$0xff]
        %v281 = vld [vmem:[%s232 + $0x68] sm:$0xff]
        %v282 = vld [vmem:[%s232 + $0x70] sm:$0xff]
        %v283 = vld [vmem:[%s232 + $0x78] sm:$0xff]
        %v284 = vld [vmem:[%s232 + $0x80] sm:$0xff]
        %v285 = vld [vmem:[%s232 + $0x88] sm:$0xff]
        %v286 = vld [vmem:[%s232 + $0x90] sm:$0xff]
        %v287 = vld [vmem:[%s232 + $0x98] sm:$0xff]
        %v288 = vunpack.c.l.bf16 %v268
        %v289 = vunpack.c.h.bf16 %v268
        %v290 = vunpack.c.l.bf16 %v269
        %v291 = vunpack.c.l.bf16 %v270
        %v292 = vunpack.c.h.bf16 %v270
        %v293 = vunpack.c.l.bf16 %v271
        %v294 = vunpack.c.l.bf16 %v272
        %v295 = vunpack.c.h.bf16 %v272
        %v296 = vunpack.c.l.bf16 %v273
        %v297 = vunpack.c.l.bf16 %v274
        %v298 = vunpack.c.h.bf16 %v274
        %v299 = vunpack.c.l.bf16 %v275
        %v300 = vunpack.c.l.bf16 %v276
        %v301 = vunpack.c.h.bf16 %v276
        %v302 = vunpack.c.l.bf16 %v277
        %v303 = vunpack.c.l.bf16 %v278
        %v304 = vunpack.c.h.bf16 %v278
        %v305 = vunpack.c.l.bf16 %v279
        %v306 = vunpack.c.l.bf16 %v280
        %v307 = vunpack.c.h.bf16 %v280
        %v308 = vunpack.c.l.bf16 %v281
        %v309 = vunpack.c.l.bf16 %v282
        %v310 = vunpack.c.h.bf16 %v282
        %v311 = vunpack.c.l.bf16 %v283
        %v312 = vlaneseq
        %v313 = vshrl.u32 %v312, 7
        %v314 = vsub.s32 0, %v313
        %v315 = vrot.slane %v266, %v314
        %v316 = vmul.f32 %v288, %v315
        %v317 = vmul.f32 %v289, %v315
        %v318 = vmul.f32 %v291, %v315
        %v319 = vmul.f32 %v292, %v315
        %v320 = vmul.f32 %v294, %v315
        %v321 = vmul.f32 %v295, %v315
        %v322 = vmul.f32 %v297, %v315
        %v323 = vmul.f32 %v298, %v315
        %v324 = vmul.f32 %v300, %v315
        %v325 = vmul.f32 %v301, %v315
        %v326 = vmul.f32 %v303, %v315
        %v327 = vmul.f32 %v304, %v315
        %v328 = vmul.f32 %v306, %v315
        %v329 = vmul.f32 %v307, %v315
        %v330 = vmul.f32 %v309, %v315
        %v331 = vmul.f32 %v310, %v315
        %v332 = vadd.f32 %v316, 0.0
        %v333 = vadd.f32 %v317, 0.0
        %v334 = vadd.f32 %v318, 0.0
        %v335 = vadd.f32 %v319, 0.0
        %v336 = vadd.f32 %v320, 0.0
        %v337 = vadd.f32 %v321, 0.0
        %v338 = vadd.f32 %v322, 0.0
        %v339 = vadd.f32 %v323, 0.0
        %v340 = vadd.f32 %v324, 0.0
        %v341 = vadd.f32 %v325, 0.0
        %v342 = vadd.f32 %v326, 0.0
        %v343 = vadd.f32 %v327, 0.0
        %v344 = vadd.f32 %v328, 0.0
        %v345 = vadd.f32 %v329, 0.0
        %v346 = vadd.f32 %v330, 0.0
        %v347 = vadd.f32 %v331, 0.0
        %v348 = vlaneseq
        %v349 = vshrl.u32 %v348, 7
        %v350 = vsub.s32 1, %v349
        %v351 = vrot.slane %v266, %v350
        %v352 = vmul.f32 %v288, %v351
        %v353 = vmul.f32 %v289, %v351
        %v354 = vmul.f32 %v290, %v351
        %v355 = vmul.f32 %v291, %v351
        %v356 = vmul.f32 %v292, %v351
        %v357 = vmul.f32 %v293, %v351
        %v358 = vmul.f32 %v294, %v351
        %v359 = vmul.f32 %v295, %v351
        %v360 = vmul.f32 %v296, %v351
        %v361 = vmul.f32 %v297, %v351
        %v362 = vmul.f32 %v298, %v351
        %v363 = vmul.f32 %v299, %v351
        %v364 = vmul.f32 %v300, %v351
        %v365 = vmul.f32 %v301, %v351
        %v366 = vmul.f32 %v302, %v351
        %v367 = vmul.f32 %v303, %v351
        %v368 = vmul.f32 %v304, %v351
        %v369 = vmul.f32 %v305, %v351
        %v370 = vmul.f32 %v306, %v351
        %v371 = vmul.f32 %v307, %v351
        %v372 = vmul.f32 %v308, %v351
        %v373 = vmul.f32 %v309, %v351
        %v374 = vmul.f32 %v310, %v351
        %v375 = vmul.f32 %v311, %v351
        %vm400 = vcmask 1046528
        %v401 = vrot.slane %v352, 1
        %v402 = vrot.slane %v353, 1
        %v403 = vsel %vm400, %v401, %v402
        %v404 = vrot.slane %v354, 1
        %v405 = vsel %vm400, %v402, %v404
        %v406 = vrot.slane %v355, 1
        %v407 = vrot.slane %v356, 1
        %v408 = vsel %vm400, %v406, %v407
        %v409 = vrot.slane %v357, 1
        %v410 = vsel %vm400, %v407, %v409
        %v411 = vrot.slane %v358, 1
        %v412 = vrot.slane %v359, 1
        %v413 = vsel %vm400, %v411, %v412
        %v414 = vrot.slane %v360, 1
        %v415 = vsel %vm400, %v412, %v414
        %v416 = vrot.slane %v361, 1
        %v417 = vrot.slane %v362, 1
        %v418 = vsel %vm400, %v416, %v417
        %v419 = vrot.slane %v363, 1
        %v420 = vsel %vm400, %v417, %v419
        %v421 = vrot.slane %v364, 1
        %v422 = vrot.slane %v365, 1
        %v423 = vsel %vm400, %v421, %v422
        %v424 = vrot.slane %v366, 1
        %v425 = vsel %vm400, %v422, %v424
        %v426 = vrot.slane %v367, 1
        %v427 = vrot.slane %v368, 1
        %v428 = vsel %vm400, %v426, %v427
        %v429 = vrot.slane %v369, 1
        %v430 = vsel %vm400, %v427, %v429
        %v431 = vrot.slane %v370, 1
        %v432 = vrot.slane %v371, 1
        %v433 = vsel %vm400, %v431, %v432
        %v434 = vrot.slane %v372, 1
        %v435 = vsel %vm400, %v432, %v434
        %v436 = vrot.slane %v373, 1
        %v437 = vrot.slane %v374, 1
        %v438 = vsel %vm400, %v436, %v437
        %v439 = vrot.slane %v375, 1
        %v440 = vsel %vm400, %v437, %v439
        %v457 = vadd.f32 %v332, %v403
        %v458 = vadd.f32 %v333, %v405
        %v459 = vadd.f32 %v334, %v408
        %v460 = vadd.f32 %v335, %v410
        %v461 = vadd.f32 %v336, %v413
        %v462 = vadd.f32 %v337, %v415
        %v463 = vadd.f32 %v338, %v418
        %v464 = vadd.f32 %v339, %v420
        %v465 = vadd.f32 %v340, %v423
        %v466 = vadd.f32 %v341, %v425
        %v467 = vadd.f32 %v342, %v428
        %v468 = vadd.f32 %v343, %v430
        %v469 = vadd.f32 %v344, %v433
        %v470 = vadd.f32 %v345, %v435
        %v471 = vadd.f32 %v346, %v438
        %v472 = vadd.f32 %v347, %v440
        %v473 = vlaneseq
        %v474 = vshrl.u32 %v473, 7
        %v475 = vsub.s32 2, %v474
        %v476 = vrot.slane %v266, %v475
        %v477 = vmul.f32 %v288, %v476
        %v478 = vmul.f32 %v289, %v476
        %v479 = vmul.f32 %v290, %v476
        %v480 = vmul.f32 %v291, %v476
        %v481 = vmul.f32 %v292, %v476
        %v482 = vmul.f32 %v293, %v476
        %v483 = vmul.f32 %v294, %v476
        %v484 = vmul.f32 %v295, %v476
        %v485 = vmul.f32 %v296, %v476
        %v486 = vmul.f32 %v297, %v476
        %v487 = vmul.f32 %v298, %v476
        %v488 = vmul.f32 %v299, %v476
        %v489 = vmul.f32 %v300, %v476
        %v490 = vmul.f32 %v301, %v476
        %v491 = vmul.f32 %v302, %v476
        %v492 = vmul.f32 %v303, %v476
        %v493 = vmul.f32 %v304, %v476
        %v494 = vmul.f32 %v305, %v476
        %v495 = vmul.f32 %v306, %v476
        %v496 = vmul.f32 %v307, %v476
        %v497 = vmul.f32 %v308, %v476
        %v498 = vmul.f32 %v309, %v476
        %v499 = vmul.f32 %v310, %v476
        %v500 = vmul.f32 %v311, %v476
        %vm525 = vcmask 1045504
        %v526 = vrot.slane %v477, 2
        %v527 = vrot.slane %v478, 2
        %v528 = vsel %vm525, %v526, %v527
        %v529 = vrot.slane %v479, 2
        %v530 = vsel %vm525, %v527, %v529
        %v531 = vrot.slane %v480, 2
        %v532 = vrot.slane %v481, 2
        %v533 = vsel %vm525, %v531, %v532
        %v534 = vrot.slane %v482, 2
        %v535 = vsel %vm525, %v532, %v534
        %v536 = vrot.slane %v483, 2
        %v537 = vrot.slane %v484, 2
        %v538 = vsel %vm525, %v536, %v537
        %v539 = vrot.slane %v485, 2
        %v540 = vsel %vm525, %v537, %v539
        %v541 = vrot.slane %v486, 2
        %v542 = vrot.slane %v487, 2
        %v543 = vsel %vm525, %v541, %v542
        %v544 = vrot.slane %v488, 2
        %v545 = vsel %vm525, %v542, %v544
        %v546 = vrot.slane %v489, 2
        %v547 = vrot.slane %v490, 2
        %v548 = vsel %vm525, %v546, %v547
        %v549 = vrot.slane %v491, 2
        %v550 = vsel %vm525, %v547, %v549
        %v551 = vrot.slane %v492, 2
        %v552 = vrot.slane %v493, 2
        %v553 = vsel %vm525, %v551, %v552
        %v554 = vrot.slane %v494, 2
        %v555 = vsel %vm525, %v552, %v554
        %v556 = vrot.slane %v495, 2
        %v557 = vrot.slane %v496, 2
        %v558 = vsel %vm525, %v556, %v557
        %v559 = vrot.slane %v497, 2
        %v560 = vsel %vm525, %v557, %v559
        %v561 = vrot.slane %v498, 2
        %v562 = vrot.slane %v499, 2
        %v563 = vsel %vm525, %v561, %v562
        %v564 = vrot.slane %v500, 2
        %v565 = vsel %vm525, %v562, %v564
        %v582 = vadd.f32 %v457, %v528
        %v583 = vadd.f32 %v458, %v530
        %v584 = vadd.f32 %v459, %v533
        %v585 = vadd.f32 %v460, %v535
        %v586 = vadd.f32 %v461, %v538
        %v587 = vadd.f32 %v462, %v540
        %v588 = vadd.f32 %v463, %v543
        %v589 = vadd.f32 %v464, %v545
        %v590 = vadd.f32 %v465, %v548
        %v591 = vadd.f32 %v466, %v550
        %v592 = vadd.f32 %v467, %v553
        %v593 = vadd.f32 %v468, %v555
        %v594 = vadd.f32 %v469, %v558
        %v595 = vadd.f32 %v470, %v560
        %v596 = vadd.f32 %v471, %v563
        %v597 = vadd.f32 %v472, %v565
        %v598 = vunpack.c.l.bf16 %v284
        %v599 = vunpack.c.h.bf16 %v284
        %v600 = vunpack.c.l.bf16 %v285
        %v601 = vlaneseq
        %v602 = vshrl.u32 %v601, 7
        %v603 = vsub.s32 3, %v602
        %v604 = vrot.slane %v266, %v603
        %v605 = vmul.f32 %v291, %v604
        %v606 = vmul.f32 %v292, %v604
        %v607 = vmul.f32 %v294, %v604
        %v608 = vmul.f32 %v295, %v604
        %v609 = vmul.f32 %v297, %v604
        %v610 = vmul.f32 %v298, %v604
        %v611 = vmul.f32 %v300, %v604
        %v612 = vmul.f32 %v301, %v604
        %v613 = vmul.f32 %v303, %v604
        %v614 = vmul.f32 %v304, %v604
        %v615 = vmul.f32 %v306, %v604
        %v616 = vmul.f32 %v307, %v604
        %v617 = vmul.f32 %v309, %v604
        %v618 = vmul.f32 %v310, %v604
        %v619 = vmul.f32 %v598, %v604
        %v620 = vmul.f32 %v599, %v604
        %v621 = vadd.f32 %v582, %v605
        %v622 = vadd.f32 %v583, %v606
        %v623 = vadd.f32 %v584, %v607
        %v624 = vadd.f32 %v585, %v608
        %v625 = vadd.f32 %v586, %v609
        %v626 = vadd.f32 %v587, %v610
        %v627 = vadd.f32 %v588, %v611
        %v628 = vadd.f32 %v589, %v612
        %v629 = vadd.f32 %v590, %v613
        %v630 = vadd.f32 %v591, %v614
        %v631 = vadd.f32 %v592, %v615
        %v632 = vadd.f32 %v593, %v616
        %v633 = vadd.f32 %v594, %v617
        %v634 = vadd.f32 %v595, %v618
        %v635 = vadd.f32 %v596, %v619
        %v636 = vadd.f32 %v597, %v620
        %v637 = vlaneseq
        %v638 = vshrl.u32 %v637, 7
        %v639 = vsub.s32 4, %v638
        %v640 = vrot.slane %v266, %v639
        %v641 = vmul.f32 %v291, %v640
        %v642 = vmul.f32 %v292, %v640
        %v643 = vmul.f32 %v293, %v640
        %v644 = vmul.f32 %v294, %v640
        %v645 = vmul.f32 %v295, %v640
        %v646 = vmul.f32 %v296, %v640
        %v647 = vmul.f32 %v297, %v640
        %v648 = vmul.f32 %v298, %v640
        %v649 = vmul.f32 %v299, %v640
        %v650 = vmul.f32 %v300, %v640
        %v651 = vmul.f32 %v301, %v640
        %v652 = vmul.f32 %v302, %v640
        %v653 = vmul.f32 %v303, %v640
        %v654 = vmul.f32 %v304, %v640
        %v655 = vmul.f32 %v305, %v640
        %v656 = vmul.f32 %v306, %v640
        %v657 = vmul.f32 %v307, %v640
        %v658 = vmul.f32 %v308, %v640
        %v659 = vmul.f32 %v309, %v640
        %v660 = vmul.f32 %v310, %v640
        %v661 = vmul.f32 %v311, %v640
        %v662 = vmul.f32 %v598, %v640
        %v663 = vmul.f32 %v599, %v640
        %v664 = vmul.f32 %v600, %v640
        %v689 = vrot.slane %v641, 1
        %v690 = vrot.slane %v642, 1
        %v691 = vsel %vm400, %v689, %v690
        %v692 = vrot.slane %v643, 1
        %v693 = vsel %vm400, %v690, %v692
        %v694 = vrot.slane %v644, 1
        %v695 = vrot.slane %v645, 1
        %v696 = vsel %vm400, %v694, %v695
        %v697 = vrot.slane %v646, 1
        %v698 = vsel %vm400, %v695, %v697
        %v699 = vrot.slane %v647, 1
        %v700 = vrot.slane %v648, 1
        %v701 = vsel %vm400, %v699, %v700
        %v702 = vrot.slane %v649, 1
        %v703 = vsel %vm400, %v700, %v702
        %v704 = vrot.slane %v650, 1
        %v705 = vrot.slane %v651, 1
        %v706 = vsel %vm400, %v704, %v705
        %v707 = vrot.slane %v652, 1
        %v708 = vsel %vm400, %v705, %v707
        %v709 = vrot.slane %v653, 1
        %v710 = vrot.slane %v654, 1
        %v711 = vsel %vm400, %v709, %v710
        %v712 = vrot.slane %v655, 1
        %v713 = vsel %vm400, %v710, %v712
        %v714 = vrot.slane %v656, 1
        %v715 = vrot.slane %v657, 1
        %v716 = vsel %vm400, %v714, %v715
        %v717 = vrot.slane %v658, 1
        %v718 = vsel %vm400, %v715, %v717
        %v719 = vrot.slane %v659, 1
        %v720 = vrot.slane %v660, 1
        %v721 = vsel %vm400, %v719, %v720
        %v722 = vrot.slane %v661, 1
        %v723 = vsel %vm400, %v720, %v722
        %v724 = vrot.slane %v662, 1
        %v725 = vrot.slane %v663, 1
        %v726 = vsel %vm400, %v724, %v725
        %v727 = vrot.slane %v664, 1
        %v728 = vsel %vm400, %v725, %v727
        %v745 = vadd.f32 %v621, %v691
        %v746 = vadd.f32 %v622, %v693
        %v747 = vadd.f32 %v623, %v696
        %v748 = vadd.f32 %v624, %v698
        %v749 = vadd.f32 %v625, %v701
        %v750 = vadd.f32 %v626, %v703
        %v751 = vadd.f32 %v627, %v706
        %v752 = vadd.f32 %v628, %v708
        %v753 = vadd.f32 %v629, %v711
        %v754 = vadd.f32 %v630, %v713
        %v755 = vadd.f32 %v631, %v716
        %v756 = vadd.f32 %v632, %v718
        %v757 = vadd.f32 %v633, %v721
        %v758 = vadd.f32 %v634, %v723
        %v759 = vadd.f32 %v635, %v726
        %v760 = vadd.f32 %v636, %v728
        %v761 = vlaneseq
        %v762 = vshrl.u32 %v761, 7
        %v763 = vsub.s32 5, %v762
        %v764 = vrot.slane %v266, %v763
        %v765 = vmul.f32 %v291, %v764
        %v766 = vmul.f32 %v292, %v764
        %v767 = vmul.f32 %v293, %v764
        %v768 = vmul.f32 %v294, %v764
        %v769 = vmul.f32 %v295, %v764
        %v770 = vmul.f32 %v296, %v764
        %v771 = vmul.f32 %v297, %v764
        %v772 = vmul.f32 %v298, %v764
        %v773 = vmul.f32 %v299, %v764
        %v774 = vmul.f32 %v300, %v764
        %v775 = vmul.f32 %v301, %v764
        %v776 = vmul.f32 %v302, %v764
        %v777 = vmul.f32 %v303, %v764
        %v778 = vmul.f32 %v304, %v764
        %v779 = vmul.f32 %v305, %v764
        %v780 = vmul.f32 %v306, %v764
        %v781 = vmul.f32 %v307, %v764
        %v782 = vmul.f32 %v308, %v764
        %v783 = vmul.f32 %v309, %v764
        %v784 = vmul.f32 %v310, %v764
        %v785 = vmul.f32 %v311, %v764
        %v786 = vmul.f32 %v598, %v764
        %v787 = vmul.f32 %v599, %v764
        %v788 = vmul.f32 %v600, %v764
        %v813 = vrot.slane %v765, 2
        %v814 = vrot.slane %v766, 2
        %v815 = vsel %vm525, %v813, %v814
        %v816 = vrot.slane %v767, 2
        %v817 = vsel %vm525, %v814, %v816
        %v818 = vrot.slane %v768, 2
        %v819 = vrot.slane %v769, 2
        %v820 = vsel %vm525, %v818, %v819
        %v821 = vrot.slane %v770, 2
        %v822 = vsel %vm525, %v819, %v821
        %v823 = vrot.slane %v771, 2
        %v824 = vrot.slane %v772, 2
        %v825 = vsel %vm525, %v823, %v824
        %v826 = vrot.slane %v773, 2
        %v827 = vsel %vm525, %v824, %v826
        %v828 = vrot.slane %v774, 2
        %v829 = vrot.slane %v775, 2
        %v830 = vsel %vm525, %v828, %v829
        %v831 = vrot.slane %v776, 2
        %v832 = vsel %vm525, %v829, %v831
        %v833 = vrot.slane %v777, 2
        %v834 = vrot.slane %v778, 2
        %v835 = vsel %vm525, %v833, %v834
        %v836 = vrot.slane %v779, 2
        %v837 = vsel %vm525, %v834, %v836
        %v838 = vrot.slane %v780, 2
        %v839 = vrot.slane %v781, 2
        %v840 = vsel %vm525, %v838, %v839
        %v841 = vrot.slane %v782, 2
        %v842 = vsel %vm525, %v839, %v841
        %v843 = vrot.slane %v783, 2
        %v844 = vrot.slane %v784, 2
        %v845 = vsel %vm525, %v843, %v844
        %v846 = vrot.slane %v785, 2
        %v847 = vsel %vm525, %v844, %v846
        %v848 = vrot.slane %v786, 2
        %v849 = vrot.slane %v787, 2
        %v850 = vsel %vm525, %v848, %v849
        %v851 = vrot.slane %v788, 2
        %v852 = vsel %vm525, %v849, %v851
        %v869 = vadd.f32 %v745, %v815
        %v870 = vadd.f32 %v746, %v817
        %v871 = vadd.f32 %v747, %v820
        %v872 = vadd.f32 %v748, %v822
        %v873 = vadd.f32 %v749, %v825
        %v874 = vadd.f32 %v750, %v827
        %v875 = vadd.f32 %v751, %v830
        %v876 = vadd.f32 %v752, %v832
        %v877 = vadd.f32 %v753, %v835
        %v878 = vadd.f32 %v754, %v837
        %v879 = vadd.f32 %v755, %v840
        %v880 = vadd.f32 %v756, %v842
        %v881 = vadd.f32 %v757, %v845
        %v882 = vadd.f32 %v758, %v847
        %v883 = vadd.f32 %v759, %v850
        %v884 = vadd.f32 %v760, %v852
        %v885 = vunpack.c.l.bf16 %v286
        %v886 = vunpack.c.h.bf16 %v286
        %v887 = vunpack.c.l.bf16 %v287
        %v888 = vlaneseq
        %v889 = vshrl.u32 %v888, 7
        %v890 = vsub.s32 6, %v889
        %v891 = vrot.slane %v266, %v890
        %v892 = vmul.f32 %v294, %v891
        %v893 = vmul.f32 %v295, %v891
        %v894 = vmul.f32 %v297, %v891
        %v895 = vmul.f32 %v298, %v891
        %v896 = vmul.f32 %v300, %v891
        %v897 = vmul.f32 %v301, %v891
        %v898 = vmul.f32 %v303, %v891
        %v899 = vmul.f32 %v304, %v891
        %v900 = vmul.f32 %v306, %v891
        %v901 = vmul.f32 %v307, %v891
        %v902 = vmul.f32 %v309, %v891
        %v903 = vmul.f32 %v310, %v891
        %v904 = vmul.f32 %v598, %v891
        %v905 = vmul.f32 %v599, %v891
        %v906 = vmul.f32 %v885, %v891
        %v907 = vmul.f32 %v886, %v891
        %v908 = vadd.f32 %v869, %v892
        %v909 = vadd.f32 %v870, %v893
        %v910 = vadd.f32 %v871, %v894
        %v911 = vadd.f32 %v872, %v895
        %v912 = vadd.f32 %v873, %v896
        %v913 = vadd.f32 %v874, %v897
        %v914 = vadd.f32 %v875, %v898
        %v915 = vadd.f32 %v876, %v899
        %v916 = vadd.f32 %v877, %v900
        %v917 = vadd.f32 %v878, %v901
        %v918 = vadd.f32 %v879, %v902
        %v919 = vadd.f32 %v880, %v903
        %v920 = vadd.f32 %v881, %v904
        %v921 = vadd.f32 %v882, %v905
        %v922 = vadd.f32 %v883, %v906
        %v923 = vadd.f32 %v884, %v907
        %v924 = vlaneseq
        %v925 = vshrl.u32 %v924, 7
        %v926 = vsub.s32 7, %v925
        %v927 = vrot.slane %v266, %v926
        %v928 = vmul.f32 %v294, %v927
        %v929 = vmul.f32 %v295, %v927
        %v930 = vmul.f32 %v296, %v927
        %v931 = vmul.f32 %v297, %v927
        %v932 = vmul.f32 %v298, %v927
        %v933 = vmul.f32 %v299, %v927
        %v934 = vmul.f32 %v300, %v927
        %v935 = vmul.f32 %v301, %v927
        %v936 = vmul.f32 %v302, %v927
        %v937 = vmul.f32 %v303, %v927
        %v938 = vmul.f32 %v304, %v927
        %v939 = vmul.f32 %v305, %v927
        %v940 = vmul.f32 %v306, %v927
        %v941 = vmul.f32 %v307, %v927
        %v942 = vmul.f32 %v308, %v927
        %v943 = vmul.f32 %v309, %v927
        %v944 = vmul.f32 %v310, %v927
        %v945 = vmul.f32 %v311, %v927
        %v946 = vmul.f32 %v598, %v927
        %v947 = vmul.f32 %v599, %v927
        %v948 = vmul.f32 %v600, %v927
        %v949 = vmul.f32 %v885, %v927
        %v950 = vmul.f32 %v886, %v927
        %v951 = vmul.f32 %v887, %v927
        %v976 = vrot.slane %v928, 1
        %v977 = vrot.slane %v929, 1
        %v978 = vsel %vm400, %v976, %v977
        %v979 = vrot.slane %v930, 1
        %v980 = vsel %vm400, %v977, %v979
        %v981 = vrot.slane %v931, 1
        %v982 = vrot.slane %v932, 1
        %v983 = vsel %vm400, %v981, %v982
        %v984 = vrot.slane %v933, 1
        %v985 = vsel %vm400, %v982, %v984
        %v986 = vrot.slane %v934, 1
        %v987 = vrot.slane %v935, 1
        %v988 = vsel %vm400, %v986, %v987
        %v989 = vrot.slane %v936, 1
        %v990 = vsel %vm400, %v987, %v989
        %v991 = vrot.slane %v937, 1
        %v992 = vrot.slane %v938, 1
        %v993 = vsel %vm400, %v991, %v992
        %v994 = vrot.slane %v939, 1
        %v995 = vsel %vm400, %v992, %v994
        %v996 = vrot.slane %v940, 1
        %v997 = vrot.slane %v941, 1
        %v998 = vsel %vm400, %v996, %v997
        %v999 = vrot.slane %v942, 1
        %v1000 = vsel %vm400, %v997, %v999
        %v1001 = vrot.slane %v943, 1
        %v1002 = vrot.slane %v944, 1
        %v1003 = vsel %vm400, %v1001, %v1002
        %v1004 = vrot.slane %v945, 1
        %v1005 = vsel %vm400, %v1002, %v1004
        %v1006 = vrot.slane %v946, 1
        %v1007 = vrot.slane %v947, 1
        %v1008 = vsel %vm400, %v1006, %v1007
        %v1009 = vrot.slane %v948, 1
        %v1010 = vsel %vm400, %v1007, %v1009
        %v1011 = vrot.slane %v949, 1
        %v1012 = vrot.slane %v950, 1
        %v1013 = vsel %vm400, %v1011, %v1012
        %v1014 = vrot.slane %v951, 1
        %v1015 = vsel %vm400, %v1012, %v1014
        %v1032 = vadd.f32 %v908, %v978
        %v1033 = vadd.f32 %v909, %v980
        %v1034 = vadd.f32 %v910, %v983
        %v1035 = vadd.f32 %v911, %v985
        %v1036 = vadd.f32 %v912, %v988
        %v1037 = vadd.f32 %v913, %v990
        %v1038 = vadd.f32 %v914, %v993
        %v1039 = vadd.f32 %v915, %v995
        %v1040 = vadd.f32 %v916, %v998
        %v1041 = vadd.f32 %v917, %v1000
        %v1042 = vadd.f32 %v918, %v1003
        %v1043 = vadd.f32 %v919, %v1005
        %v1044 = vadd.f32 %v920, %v1008
        %v1045 = vadd.f32 %v921, %v1010
        %v1046 = vadd.f32 %v922, %v1013
        %v1047 = vadd.f32 %v923, %v1015
        %v1048 = vlaneseq
        %v1049 = vshrl.u32 %v1048, 7
        %v1050 = vsub.s32 0, %v1049
        %v1051 = vrot.slane %v267, %v1050
        %v1052 = vmul.f32 %v294, %v1051
        %v1053 = vmul.f32 %v295, %v1051
        %v1054 = vmul.f32 %v296, %v1051
        %v1055 = vmul.f32 %v297, %v1051
        %v1056 = vmul.f32 %v298, %v1051
        %v1057 = vmul.f32 %v299, %v1051
        %v1058 = vmul.f32 %v300, %v1051
        %v1059 = vmul.f32 %v301, %v1051
        %v1060 = vmul.f32 %v302, %v1051
        %v1061 = vmul.f32 %v303, %v1051
        %v1062 = vmul.f32 %v304, %v1051
        %v1063 = vmul.f32 %v305, %v1051
        %v1064 = vmul.f32 %v306, %v1051
        %v1065 = vmul.f32 %v307, %v1051
        %v1066 = vmul.f32 %v308, %v1051
        %v1067 = vmul.f32 %v309, %v1051
        %v1068 = vmul.f32 %v310, %v1051
        %v1069 = vmul.f32 %v311, %v1051
        %v1070 = vmul.f32 %v598, %v1051
        %v1071 = vmul.f32 %v599, %v1051
        %v1072 = vmul.f32 %v600, %v1051
        %v1073 = vmul.f32 %v885, %v1051
        %v1074 = vmul.f32 %v886, %v1051
        %v1075 = vmul.f32 %v887, %v1051
        %v1100 = vrot.slane %v1052, 2
        %v1101 = vrot.slane %v1053, 2
        %v1102 = vsel %vm525, %v1100, %v1101
        %v1103 = vrot.slane %v1054, 2
        %v1104 = vsel %vm525, %v1101, %v1103
        %v1105 = vrot.slane %v1055, 2
        %v1106 = vrot.slane %v1056, 2
        %v1107 = vsel %vm525, %v1105, %v1106
        %v1108 = vrot.slane %v1057, 2
        %v1109 = vsel %vm525, %v1106, %v1108
        %v1110 = vrot.slane %v1058, 2
        %v1111 = vrot.slane %v1059, 2
        %v1112 = vsel %vm525, %v1110, %v1111
        %v1113 = vrot.slane %v1060, 2
        %v1114 = vsel %vm525, %v1111, %v1113
        %v1115 = vrot.slane %v1061, 2
        %v1116 = vrot.slane %v1062, 2
        %v1117 = vsel %vm525, %v1115, %v1116
        %v1118 = vrot.slane %v1063, 2
        %v1119 = vsel %vm525, %v1116, %v1118
        %v1120 = vrot.slane %v1064, 2
        %v1121 = vrot.slane %v1065, 2
        %v1122 = vsel %vm525, %v1120, %v1121
        %v1123 = vrot.slane %v1066, 2
        %v1124 = vsel %vm525, %v1121, %v1123
        %v1125 = vrot.slane %v1067, 2
        %v1126 = vrot.slane %v1068, 2
        %v1127 = vsel %vm525, %v1125, %v1126
        %v1128 = vrot.slane %v1069, 2
        %v1129 = vsel %vm525, %v1126, %v1128
        %v1130 = vrot.slane %v1070, 2
        %v1131 = vrot.slane %v1071, 2
        %v1132 = vsel %vm525, %v1130, %v1131
        %v1133 = vrot.slane %v1072, 2
        %v1134 = vsel %vm525, %v1131, %v1133
        %v1135 = vrot.slane %v1073, 2
        %v1136 = vrot.slane %v1074, 2
        %v1137 = vsel %vm525, %v1135, %v1136
        %v1138 = vrot.slane %v1075, 2
        %v1139 = vsel %vm525, %v1136, %v1138
        %v1156 = vadd.f32 %v1032, %v1102
        %v1157 = vadd.f32 %v1033, %v1104
        %v1158 = vadd.f32 %v1034, %v1107
        %v1159 = vadd.f32 %v1035, %v1109
        %v1160 = vadd.f32 %v1036, %v1112
        %v1161 = vadd.f32 %v1037, %v1114
        %v1162 = vadd.f32 %v1038, %v1117
        %v1163 = vadd.f32 %v1039, %v1119
        %v1164 = vadd.f32 %v1040, %v1122
        %v1165 = vadd.f32 %v1041, %v1124
        %v1166 = vadd.f32 %v1042, %v1127
        %v1167 = vadd.f32 %v1043, %v1129
        %v1168 = vadd.f32 %v1044, %v1132
        %v1169 = vadd.f32 %v1045, %v1134
        %v1170 = vadd.f32 %v1046, %v1137
        %v1171 = vadd.f32 %v1047, %v1139
        %v1172 = vpack.c.bf16 %v1157, %v1156
        %v1173 = vpack.c.bf16 %v1159, %v1158
        %v1174 = vpack.c.bf16 %v1161, %v1160
        %v1175 = vpack.c.bf16 %v1163, %v1162
        %v1176 = vpack.c.bf16 %v1165, %v1164
        %v1177 = vpack.c.bf16 %v1167, %v1166
        %v1178 = vpack.c.bf16 %v1169, %v1168
        %v1179 = vpack.c.bf16 %v1171, %v1170
        %v1188 = vunpack.c.l.b16 %v1172
        %v1189 = vunpack.c.h.b16 %v1172
        %v1190 = vunpack.c.l.b16 %v1173
        %v1191 = vunpack.c.h.b16 %v1173
        %v1192 = vunpack.c.l.b16 %v1174
        %v1193 = vunpack.c.h.b16 %v1174
        %v1194 = vunpack.c.l.b16 %v1175
        %v1195 = vunpack.c.h.b16 %v1175
        %v1196 = vunpack.c.l.b16 %v1176
        %v1197 = vunpack.c.h.b16 %v1176
        %v1198 = vunpack.c.l.b16 %v1177
        %v1199 = vunpack.c.h.b16 %v1177
        %v1200 = vunpack.c.l.b16 %v1178
        %v1201 = vunpack.c.h.b16 %v1178
        %v1202 = vunpack.c.l.b16 %v1179
        %v1203 = vunpack.c.h.b16 %v1179
        %v1204 = vpack.c.b16 %v1188, %v1188
        %v1205 = vpack.c.b16 %v1189, %v1189
        %v1206 = vpack.c.b16 %v1190, %v1190
        %v1207 = vpack.c.b16 %v1191, %v1191
        %v1208 = vpack.c.b16 %v1192, %v1192
        %v1209 = vpack.c.b16 %v1193, %v1193
        %v1210 = vpack.c.b16 %v1194, %v1194
        %v1211 = vpack.c.b16 %v1195, %v1195
        %v1212 = vpack.c.b16 %v1196, %v1196
        %v1213 = vpack.c.b16 %v1197, %v1197
        %v1214 = vpack.c.b16 %v1198, %v1198
        %v1215 = vpack.c.b16 %v1199, %v1199
        %v1216 = vpack.c.b16 %v1200, %v1200
        %v1217 = vpack.c.b16 %v1201, %v1201
        %v1218 = vpack.c.b16 %v1202, %v1202
        %v1219 = vpack.c.b16 %v1203, %v1203
        %1236 = vst [vmem:[%s186] sm:$0xf] %v1204
        %1237 = vst [vmem:[%s186 + $0x4] sm:$0xf] %v1205
        %1238 = vst [vmem:[%s186 + $0x8] sm:$0xf] %v1206
        %1239 = vst [vmem:[%s186 + $0xc] sm:$0xf] %v1207
        %1240 = vst [vmem:[%s186 + $0x10] sm:$0xf] %v1208
        %1241 = vst [vmem:[%s186 + $0x14] sm:$0xf] %v1209
        %1242 = vst [vmem:[%s186 + $0x18] sm:$0xf] %v1210
        %1243 = vst [vmem:[%s186 + $0x1c] sm:$0xf] %v1211
        %1244 = vst [vmem:[%s186 + $0x20] sm:$0xf] %v1212
        %1245 = vst [vmem:[%s186 + $0x24] sm:$0xf] %v1213
        %1246 = vst [vmem:[%s186 + $0x28] sm:$0xf] %v1214
        %1247 = vst [vmem:[%s186 + $0x2c] sm:$0xf] %v1215
        %1248 = vst [vmem:[%s186 + $0x30] sm:$0xf] %v1216
        %1249 = vst [vmem:[%s186 + $0x34] sm:$0xf] %v1217
        %1250 = vst [vmem:[%s186 + $0x38] sm:$0xf] %v1218
        %1251 = vst [vmem:[%s186 + $0x3c] sm:$0xf] %v1219
        %v1252 = vadd.f32 %v1156, %v1157
        %v1253 = vadd.f32 %v1252, %v1158
        %v1254 = vadd.f32 %v1253, %v1159
        %v1255 = vadd.f32 %v1254, %v1160
        %v1256 = vadd.f32 %v1255, %v1161
        %v1257 = vadd.f32 %v1256, %v1162
        %v1258 = vadd.f32 %v1257, %v1163
        %v1259 = vadd.f32 %v1258, %v1164
        %v1260 = vadd.f32 %v1259, %v1165
        %v1261 = vadd.f32 %v1260, %v1166
        %v1262 = vadd.f32 %v1261, %v1167
        %v1263 = vadd.f32 %v1262, %v1168
        %v1264 = vadd.f32 %v1263, %v1169
        %v1265 = vadd.f32 %v1264, %v1170
        %v1266 = vadd.f32 %v1265, %v1171
        %v1267 = vrot.slane %v1266, 4
        %v1268 = vadd.f32 %v1266, %v1267
        %v1269 = vrot.slane %v1268, 2
        %v1270 = vadd.f32 %v1268, %v1269
        %v1271 = vrot.slane %v1270, 1
        %v1272 = vadd.f32 %v1270, %v1271
        %1273 = vst [vmem:[%s192] sm:$0x1] %v1272
        %v1274 = vmul.f32 %v1156, %v1156
        %v1275 = vmul.f32 %v1157, %v1157
        %v1276 = vmul.f32 %v1158, %v1158
        %v1277 = vmul.f32 %v1159, %v1159
        %v1278 = vmul.f32 %v1160, %v1160
        %v1279 = vmul.f32 %v1161, %v1161
        %v1280 = vmul.f32 %v1162, %v1162
        %v1281 = vmul.f32 %v1163, %v1163
        %v1282 = vmul.f32 %v1164, %v1164
        %v1283 = vmul.f32 %v1165, %v1165
        %v1284 = vmul.f32 %v1166, %v1166
        %v1285 = vmul.f32 %v1167, %v1167
        %v1286 = vmul.f32 %v1168, %v1168
        %v1287 = vmul.f32 %v1169, %v1169
        %v1288 = vmul.f32 %v1170, %v1170
        %v1289 = vmul.f32 %v1171, %v1171
        %v1290 = vadd.f32 %v1274, %v1275
        %v1291 = vadd.f32 %v1290, %v1276
        %v1292 = vadd.f32 %v1291, %v1277
        %v1293 = vadd.f32 %v1292, %v1278
        %v1294 = vadd.f32 %v1293, %v1279
        %v1295 = vadd.f32 %v1294, %v1280
        %v1296 = vadd.f32 %v1295, %v1281
        %v1297 = vadd.f32 %v1296, %v1282
        %v1298 = vadd.f32 %v1297, %v1283
        %v1299 = vadd.f32 %v1298, %v1284
        %v1300 = vadd.f32 %v1299, %v1285
        %v1301 = vadd.f32 %v1300, %v1286
        %v1302 = vadd.f32 %v1301, %v1287
        %v1303 = vadd.f32 %v1302, %v1288
        %v1304 = vadd.f32 %v1303, %v1289
        %v1305 = vrot.slane %v1304, 4
        %v1306 = vadd.f32 %v1304, %v1305
        %v1307 = vrot.slane %v1306, 2
        %v1308 = vadd.f32 %v1306, %v1307
        %v1309 = vrot.slane %v1308, 1
        %v1310 = vadd.f32 %v1308, %v1309
        %1311 = vst [vmem:[%s198] sm:$0x1] %v1310
        %s1312 = sand.u32 %s66, 1
        %s1313 = scalar_lea.sflag [#allocation6], %s1312
        %s1314 = sand.u32 %s66, 1
        %s1315 = smul.addr %s1314, 64
        %s1316 = scalar_lea.vmem [#allocation7], %s1315
        %s1317 = sand.u32 %s23, 1
        %s1318 = scalar_lea.sflag [#allocation9], %s1317
        %s1319 = sand.u32 %s94, 1
        %s1320 = scalar_lea.vmem [#allocation8], %s1319
        %s1321 = sand.u32 %s23, 1
        %s1322 = scalar_lea.sflag [#allocation9], %s1321
        %s1323 = sand.u32 %s122, 1
        %s1324 = scalar_lea.vmem [#allocation10], %s1323
        // Predicated region
        $region45: #{tpu_custom_call.1} parent=23 // pred_check
          %p1325 = pneg %p76
        $region46: #{tpu_custom_call.1} parent=23 // pred_check_branch
          %1327 = sbr.rel (%p1325) target = $region48
        $region47: #{tpu_custom_call.1} parent=23 // pred_region
          %s1328 = smul.u32 8, %s28
          %s1330 = ssub.s32 1024, 1024
          %1331 = vsyncadd %s1313, %s1330
          %s1332 = smul.addr %s1328, 2
          %s1333 = smul.addr %s27, 32
          %s1334 = sadd.s32 %s1332, %s1333
          %s1335 = smul.addr %s1334, 64
          %s1336 = scalar_lea.hbm %s2, %s1335
          %s1337 = sshll.u32 %s1316, 4
          %s1338 = int_to_ptr.vmem [resolvable:$true] %s1337
          %1343 = dma.vmem_to_hbm [thread:$0]  %s1338, 1024, %s1336, %s1313, 64, 64, 4
        $region48: #{tpu_custom_call.1} parent=23 // pred_fallthru
          _
        // Predicated region
        $region49: #{tpu_custom_call.1} parent=23 // pred_check
          %p1344 = pneg %p104
        $region50: #{tpu_custom_call.1} parent=23 // pred_check_branch
          %1346 = sbr.rel (%p1344) target = $region52
        $region51: #{tpu_custom_call.1} parent=23 // pred_region
          %s1348 = ssub.s32 16, 16
          %1349 = vsyncadd %s1318, %s1348
          %s1350 = smul.addr %s27, 2
          %s1351 = sadd.s32 %s28, %s1350
          %s1352 = smul.addr %s1351, 16
          %s1353 = scalar_lea.hbm %s3, %s1352
          %s1355 = sshll.u32 %s1320, 4
          %s1356 = int_to_ptr.vmem [resolvable:$true] %s1355
          %1358 = dma.vmem_to_hbm [thread:$0]  %s1356, 16, %s1353, %s1318
        $region52: #{tpu_custom_call.1} parent=23 // pred_fallthru
          _
        // Predicated region
        $region53: #{tpu_custom_call.1} parent=23 // pred_check
          %p1359 = pneg %p132
        $region54: #{tpu_custom_call.1} parent=23 // pred_check_branch
          %1361 = sbr.rel (%p1359) target = $region56
        $region55: #{tpu_custom_call.1} parent=23 // pred_region
          %s1363 = ssub.s32 16, 16
          %1364 = vsyncadd %s1322, %s1363
          %s1365 = smul.addr %s27, 2
          %s1366 = sadd.s32 %s28, %s1365
          %s1367 = smul.addr %s1366, 16
          %s1368 = scalar_lea.hbm %s4, %s1367
          %s1370 = sshll.u32 %s1324, 4
          %s1371 = int_to_ptr.vmem [resolvable:$true] %s1370
          %1373 = dma.vmem_to_hbm [thread:$0]  %s1371, 16, %s1368, %s1322
        $region56: #{tpu_custom_call.1} parent=23 // pred_fallthru
          _
      $region24: #{tpu_custom_call.1} parent=5 // pred_fallthru
        _
      %p1374 = scmp.le.s32.totalorder 2, %s18
      // Predicated region
      $region57: #{tpu_custom_call.1} parent=5 // pred_check
        %p1375 = pneg %p1374
      $region58: #{tpu_custom_call.1} parent=5 // pred_check_branch
        %1377 = sbr.rel (%p1375) target = $region60
      $region59: #{tpu_custom_call.1} parent=5 // pred_region
        %s1378 = ssub.s32 %s18, 2
        // Predicated region
        $region61: #{tpu_custom_call.1} parent=59 // pred_check
          %p1379 = pneg %p82
        $region62: #{tpu_custom_call.1} parent=59 // pred_check_branch
          %1381 = sbr.rel (%p1379) target = $region64
        $region63: #{tpu_custom_call.1} parent=59 // pred_region
          %s1382 = sand.u32 %s67, 1
          %s1383 = scalar_lea.sflag [#allocation6], %s1382
          %s1384 = sand.u32 %s67, 1
          %s1385 = smul.addr %s1384, 64
          %s1386 = scalar_lea.vmem [#allocation7], %s1385
          %1387 = dma.done %s1383, 1024
        $region64: #{tpu_custom_call.1} parent=59 // pred_fallthru
          _
        // Predicated region
        $region65: #{tpu_custom_call.1} parent=59 // pred_check
          %p1388 = pneg %p110
        $region66: #{tpu_custom_call.1} parent=59 // pred_check_branch
          %1390 = sbr.rel (%p1388) target = $region68
        $region67: #{tpu_custom_call.1} parent=59 // pred_region
          %s1391 = sand.u32 %s24, 1
          %s1392 = scalar_lea.sflag [#allocation9], %s1391
          %s1393 = sand.u32 %s95, 1
          %s1394 = scalar_lea.vmem [#allocation8], %s1393
          %1395 = dma.done %s1392, 16
        $region68: #{tpu_custom_call.1} parent=59 // pred_fallthru
          _
        // Predicated region
        $region69: #{tpu_custom_call.1} parent=59 // pred_check
          %p1396 = pneg %p138
        $region70: #{tpu_custom_call.1} parent=59 // pred_check_branch
          %1398 = sbr.rel (%p1396) target = $region72
        $region71: #{tpu_custom_call.1} parent=59 // pred_region
          %s1399 = sand.u32 %s24, 1
          %s1400 = scalar_lea.sflag [#allocation9], %s1399
          %s1401 = sand.u32 %s123, 1
          %s1402 = scalar_lea.vmem [#allocation10], %s1401
          %1403 = dma.done %s1400, 16
        $region72: #{tpu_custom_call.1} parent=59 // pred_fallthru
          _
      $region60: #{tpu_custom_call.1} parent=5 // pred_fallthru
        _
    $region6: #{tpu_custom_call.1} parent=1 // loop_footer
      %s22 = sadd.s32 1, %s18
    $region7: #{tpu_custom_call.1} parent=1 // loop_footer_branch
      %17 = sbr.rel target = $region3
    $region8: #{tpu_custom_call.1} parent=1 // loop_exit
      _
    %1404 = vsyncpa [#allocation5], 1
    %s1405 = scalar_lea.sflag [#allocation5], 1
    %1406 = vsyncpa %s1405, 1
    %1407 = vsyncpa [#allocation6], 1
    %s1408 = scalar_lea.sflag [#allocation6], 1
    %1409 = vsyncpa %s1408, 1
    %1410 = vsyncpa [#allocation9], 1
    %s1411 = scalar_lea.sflag [#allocation9], 1
    %1412 = vsyncpa %s1411, 1
  %1413 = vsyncmov [#allocation3]
  %s1414 = vpop.sfrf %1413
  %p1415 = scmp.eq.s32.totalorder %s1414, 0
  %p1416 = pneg %p1415
  %1418 = shalt.err (%p1416)
  %s1419 = scalar_lea.sflag [#allocation3], 1
  %1420 = vsyncmov %s1419
  %s1421 = vpop.sfrf %1420
  %p1422 = scmp.eq.s32.totalorder %s1421, 0
  %p1423 = pneg %p1422
  %1425 = shalt.err (%p1423)

</llo_original>
